<compile_context>
chip_gen: v7x
topology: tpu7x:2x2x1
jax: 0.10.0
libtpu: 0.0.40
codegen_flags: <defaults>
</compile_context>

<pallas_src>
import functools

import jax
import jax.numpy as jnp
from jax.experimental import pallas as pl
from jax.experimental.pallas import tpu as pltpu


def _softplus(p):
    # Numerically stable log(1 + exp(p)): exp never overflows, precise for p << 0.
    return jnp.maximum(p, 0.0) + jnp.log1p(jnp.exp(-jnp.abs(p)))


def _linear_variational_kernel(matmul_dtype,
                               x_ref, w_mu_ref, w_p_ref, eps_w_ref,
                               b_mu_ref, b_p_ref, eps_b_ref,
                               z_ref, kl_ref, acc_ref):
    i = pl.program_id(0)            # batch tile (outermost; usually extent 1)
    k = pl.program_id(2)            # in_features (reduction) tile, innermost
    nk = pl.num_programs(2)

    # ---- reparameterize the weight tile (f32, needed for both matmul and KL) ----
    w_mu = w_mu_ref[...]
    eps_w = eps_w_ref[...]
    sigma_w = _softplus(w_p_ref[...])
    w = w_mu + eps_w * sigma_w

    # ---- init (k == 0): accumulator <- reparameterized bias; kl block <- bias KL / 0 ----
    @pl.when(k == 0)
    def _init():
        sigma_b = _softplus(b_p_ref[...])
        eps_b = eps_b_ref[...]
        b = b_mu_ref[...] + eps_b * sigma_b                        # (1, tile_n)
        acc_ref[...] = jnp.broadcast_to(b, acc_ref.shape)
        # Bias KL counted exactly once (first batch tile); spread over the 8 sublane rows
        # of the kl block (division by 8 is exact, the wrapper sum reconstructs it).
        kl_b = 0.5 * (b * b - eps_b * eps_b) - jnp.log(sigma_b)    # (1, tile_n)
        kl_init = jnp.where(i == 0, 0.125 * kl_b, jnp.zeros_like(kl_b))
        kl_ref[...] = jnp.broadcast_to(kl_init, kl_ref.shape)

    # ---- z tile: bf16 inputs on the MXU, f32 accumulation ----
    acc_ref[...] += jnp.dot(x_ref[...], w.astype(matmul_dtype),
                            preferred_element_type=jnp.float32)

    @pl.when(k == nk - 1)
    def _finalize():
        z_ref[...] = acc_ref[...].astype(z_ref.dtype)

    # ---- KL of the weight tile (exactly once, on the first batch tile).
    # Lane-preserving partial reduction: fold sublane groups of 8 rows with VALU adds
    # into an (8, tile_n) partial; the remaining 8*N -> scalar reduce happens outside.
    @pl.when(i == 0)
    def _kl_w():
        kl_elem = 0.5 * (w * w - eps_w * eps_w) - jnp.log(sigma_w)   # (tile_k, tile_n)
        rows, cols = kl_elem.shape
        if rows % 8 == 0:
            part = kl_elem.reshape(rows // 8, 8, cols).sum(axis=0)   # pure vreg adds
        else:
            part = jnp.broadcast_to(
                0.125 * jnp.sum(kl_elem, axis=0, keepdims=True), (8, cols))
        kl_ref[...] += part


def _pick_tile_m(M):
    # Weights (and the reparam/transcendental work) are re-streamed once per batch tile,
    # so make tile_m as large as possible — ideally the full batch (gm = 1).
    if M <= 1024:
        return M
    for c in (1024, 512, 256, 128, 64, 32, 16):
        if M % c == 0:
            return c
    return M


def _pick_tile_k(K):
    for c in (512, 256, 128):
        if K % c == 0:
            return c
    return K


def _pick_tile_n(N):
    # Prefer gn >= 2 so both TensorCores get work on v7x megacore (gm is usually 1).
    for c in (1024, 512, 256, 128):
        if N % c == 0 and N // c >= 2:
            return c
    for c in (1024, 512, 256, 128):
        if N % c == 0:
            return c
    return N


def linear_variational_forward(x, w_mu, w_p, b_mu, b_p, eps_w, eps_b, n_batches,
                               *, tile_m=None, tile_k=None, tile_n=None,
                               matmul_dtype=jnp.bfloat16):
    """Returns (z, kl_div); kl_div already divided by n_batches (done outside the kernel).

    matmul_dtype=jnp.float32 is the escape hatch for exact fp32 Linear parity (slower)."""
    w_mu = jnp.asarray(w_mu, jnp.float32)
    w_p = jnp.asarray(w_p, jnp.float32)
    eps_w = jnp.asarray(eps_w, jnp.float32)
    b_mu = jnp.asarray(b_mu, jnp.float32).reshape(1, -1)
    b_p = jnp.asarray(b_p, jnp.float32).reshape(1, -1)
    eps_b = jnp.asarray(eps_b, jnp.float32).reshape(1, -1)
    # x is only consumed by the MXU at matmul_dtype precision; cast once here so the
    # (gn-times) re-streamed x traffic is halved and the per-step cast disappears.
    x = jnp.asarray(x).astype(matmul_dtype)

    M, K = x.shape
    K2, N = w_mu.shape
    assert K == K2 and w_p.shape == (K, N) and eps_w.shape == (K, N)
    assert b_mu.shape == (1, N) and b_p.shape == (1, N) and eps_b.shape == (1, N)

    tile_m = tile_m or _pick_tile_m(M)
    tile_k = tile_k or _pick_tile_k(K)
    tile_n = tile_n or _pick_tile_n(N)
    assert M % tile_m == 0 and K % tile_k == 0 and N % tile_n == 0, \
        "dims must be divisible by the chosen tiles (pad to multiples of 8 / 128)"
    assert tile_m == M or tile_m % 8 == 0
    assert tile_k == K or tile_k % 8 == 0
    assert tile_n == N or tile_n % 128 == 0
    gm, gn, gk = M // tile_m, N // tile_n, K // tile_k

    x_bytes = jnp.dtype(matmul_dtype).itemsize

    # VMEM footprint: three double-buffered f32 weight tiles dominate.
    need = (3 * 2 * tile_k * tile_n * 4          # w_mu / w_p / eps_w (double-buffered)
            + 2 * tile_m * tile_k * x_bytes      # x
            + 2 * tile_m * tile_n * 4            # z
            + 3 * 2 * 8 * tile_n * 4             # bias rows (sublane-padded)
            + 2 * 8 * tile_n * 4                 # kl partial block
            + tile_m * tile_n * 4)               # f32 accumulator scratch
    try:
        vmem_cap = int(pltpu.get_tpu_info().vmem_capacity_bytes)   # 128 MiB v5e/v6e, 64 MiB v7x
    except Exception:
        vmem_cap = 64 * 1024 * 1024
    # ~20% headroom for compiler-internal scratch (important on v7x's 64 MiB).
    vmem_limit = int(min(int(0.8 * vmem_cap), max(32 * 1024 * 1024, 2 * need)))

    cost = pl.CostEstimate(
        flops=2 * M * K * N + 8 * K * N * gm + 8 * N * gn,
        transcendentals=2 * K * N * gm + K * N + 8 * N * gn,
        bytes_accessed=(3 * K * N * 4 * gm            # weight streams (re-read per batch tile)
                        + M * K * x_bytes * gn        # x (re-read per out tile)
                        + M * N * 4                   # z writeback
                        + gm * 8 * N * 4              # kl partials
                        + 3 * N * 4 * gn * gm),       # bias rows
    )

    kernel = functools.partial(_linear_variational_kernel, matmul_dtype)

    z, kl_parts = pl.pallas_call(
        kernel,
        out_shape=(
            jax.ShapeDtypeStruct((M, N), jnp.float32),
            jax.ShapeDtypeStruct((gm * 8, N), jnp.float32),
        ),
        grid_spec=pltpu.PrefetchScalarGridSpec(
            num_scalar_prefetch=0,
            grid=(gm, gn, gk),
            in_specs=[
                pl.BlockSpec((tile_m, tile_k), lambda i, j, k: (i, k)),      # x (bf16)
                pl.BlockSpec((tile_k, tile_n), lambda i, j, k: (k, j)),      # w_mu
                pl.BlockSpec((tile_k, tile_n), lambda i, j, k: (k, j)),      # w_p
                pl.BlockSpec((tile_k, tile_n), lambda i, j, k: (k, j)),      # eps_w
                pl.BlockSpec((1, tile_n), lambda i, j, k: (0, j)),           # b_mu
                pl.BlockSpec((1, tile_n), lambda i, j, k: (0, j)),           # b_p
                pl.BlockSpec((1, tile_n), lambda i, j, k: (0, j)),           # eps_b
            ],
            out_specs=(
                pl.BlockSpec((tile_m, tile_n), lambda i, j, k: (i, j)),      # z
                pl.BlockSpec((8, tile_n), lambda i, j, k: (i, j)),           # kl partials
            ),
            scratch_shapes=[pltpu.VMEM((tile_m, tile_n), jnp.float32)],
        ),
        compiler_params=pltpu.CompilerParams(
            dimension_semantics=("parallel", "parallel", "arbitrary"),
            vmem_limit_bytes=vmem_limit,
        ),
        cost_estimate=cost,
    )(x, w_mu, w_p, eps_w, b_mu, b_p, eps_b)

    # Only the i == 0 row of kl blocks is nonzero (others are zero-initialized), so a
    # plain sum is exact.  Divide by n_batches outside the kernel (never recompiles).
    kl = kl_parts.sum() / n_batches
    return z, kl


if __name__ == "__main__":
    in_features, out_features, n_batches = 256, 256, 4

    key = jax.random.PRNGKey(0)
    k_x1, k_x2, k_wmu, k_wp, k_epsw, k_epsb = jax.random.split(key, 6)

    # Parameter init mirroring LinearVariational.__init__:
    #   w_mu ~ N(0, 0.001), w_p ~ N(-2.5, 0.001), b_mu = b_p = 0
    w_mu = 0.001 * jax.random.normal(k_wmu, (in_features, out_features), jnp.float32)
    w_p = -2.5 + 0.001 * jax.random.normal(k_wp, (in_features, out_features), jnp.float32)
    b_mu = jnp.zeros((out_features,), jnp.float32)
    b_p = jnp.zeros((out_features,), jnp.float32)

    # torch.randn_like equivalents, drawn in glue JAX for determinism.
    eps_w = jax.random.normal(k_epsw, (in_features, out_features), jnp.float32)
    eps_b = jax.random.normal(k_epsb, (1, out_features), jnp.float32)

    # ---- pure-JAX references (original torch formulas) ----
    sigma_w = jnp.log(1.0 + jnp.exp(w_p))
    sigma_b = jnp.log(1.0 + jnp.exp(b_p)).reshape(1, -1)
    w_r = w_mu + eps_w * sigma_w
    b_r = b_mu.reshape(1, -1) + eps_b * sigma_b

    def kl_sum(sample, mu, sigma):
        log_prior = -0.5 * sample * sample
        log_p_q = -0.5 * ((sample - mu) / sigma) ** 2 - jnp.log(sigma)
        return jnp.sum(log_p_q - log_prior)

    kl_ref = (kl_sum(w_r, w_mu, sigma_w) +
              kl_sum(b_r, b_mu.reshape(1, -1), sigma_b)) / n_batches

    # Mirror the module's side effect: parent.accumulated_kl_div += kl (glue, not kernel).
    parent = {"accumulated_kl_div": 0.0}

    def run_and_check(batch, key_x, **tile_kwargs):
        x = jax.random.normal(key_x, (batch, in_features), jnp.float32)
        z, kl = linear_variational_forward(
            x, w_mu, w_p, b_mu, b_p, eps_w, eps_b, n_batches, **tile_kwargs)
        jax.block_until_ready((z, kl))
        parent["accumulated_kl_div"] += float(kl)

        z_f32 = x @ w_r + b_r
        z_bf16 = jnp.dot(x.astype(jnp.bfloat16), w_r.astype(jnp.bfloat16),
                         preferred_element_type=jnp.float32) + b_r
        assert jnp.allclose(z, z_bf16, atol=1e-2, rtol=1e-2), "z mismatch (bf16-precision ref)"
        assert jnp.allclose(z, z_f32, atol=6e-2, rtol=6e-2), "z mismatch (f32 ref)"
        assert jnp.allclose(kl, kl_ref, atol=2.0, rtol=1e-4), "kl mismatch"

    # Run 1: auto tiling -> tile_m = batch (gm = 1, weights streamed/reparameterized once),
    #        tile_n = 128 (gn = 2, both v7x TensorCores busy).
    run_and_check(16, k_x1)
    # Run 2: force a 2x2x2 grid to exercise K-accumulation, KL gating and multi-batch tiles.
    run_and_check(32, k_x2, tile_m=16, tile_k=128, tile_n=128)

    print("KERNEL_OK")
</pallas_src>

<mosaic_0001>
module attributes {stable_mosaic.version = 11 : i64} {
  func.func @_linear_variational_kernel(%arg0: i32, %arg1: i32, %arg2: i32, %arg3: memref<16x256xbf16, #tpu.memory_space<vmem>>, %arg4: memref<256x128xf32, #tpu.memory_space<vmem>>, %arg5: memref<256x128xf32, #tpu.memory_space<vmem>>, %arg6: memref<256x128xf32, #tpu.memory_space<vmem>>, %arg7: memref<1x128xf32, #tpu.memory_space<vmem>>, %arg8: memref<1x128xf32, #tpu.memory_space<vmem>>, %arg9: memref<1x128xf32, #tpu.memory_space<vmem>>, %arg10: memref<16x128xf32, #tpu.memory_space<vmem>>, %arg11: memref<8x128xf32, #tpu.memory_space<vmem>>, %arg12: memref<16x128xf32, #tpu.memory_space<vmem>>) attributes {dimension_semantics = [#tpu.dimension_semantics<parallel>, #tpu.dimension_semantics<parallel>, #tpu.dimension_semantics<arbitrary>], iteration_bounds = array<i64: 1, 2, 1>, scalar_prefetch = 0 : i64, scratch_operands = 1 : i64, tpu.core_type = #tpu.core_type<tc>, window_params = [{transform_indices = @transform_0, window_bounds = array<i64: 16, 256>}, {transform_indices = @transform_1, window_bounds = array<i64: 256, 128>}, {transform_indices = @transform_2, window_bounds = array<i64: 256, 128>}, {transform_indices = @transform_3, window_bounds = array<i64: 256, 128>}, {transform_indices = @transform_4, window_bounds = array<i64: 1, 128>}, {transform_indices = @transform_5, window_bounds = array<i64: 1, 128>}, {transform_indices = @transform_6, window_bounds = array<i64: 1, 128>}, {transform_indices = @transform_7, window_bounds = array<i64: 16, 128>}, {transform_indices = @transform_8, window_bounds = array<i64: 8, 128>}]} {
    %c0 = arith.constant 0 : index
    %c0_0 = arith.constant 0 : index
    %0 = vector.load %arg4[%c0, %c0_0] : memref<256x128xf32, #tpu.memory_space<vmem>>, vector<256x128xf32>
    %c0_1 = arith.constant 0 : index
    %c0_2 = arith.constant 0 : index
    %1 = vector.load %arg6[%c0_1, %c0_2] : memref<256x128xf32, #tpu.memory_space<vmem>>, vector<256x128xf32>
    %c0_3 = arith.constant 0 : index
    %c0_4 = arith.constant 0 : index
    %2 = vector.load %arg5[%c0_3, %c0_4] : memref<256x128xf32, #tpu.memory_space<vmem>>, vector<256x128xf32>
    %cst = arith.constant 0.000000e+00 : f32
    %3 = vector.broadcast %cst : f32 to vector<256x128xf32>
    %4 = arith.maximumf %2, %3 : vector<256x128xf32>
    %5 = math.absf %2 : vector<256x128xf32>
    %cst_5 = arith.constant 0.000000e+00 : f32
    %6 = vector.broadcast %cst_5 : f32 to vector<256x128xf32>
    %7 = arith.subf %6, %5 : vector<256x128xf32>
    %8 = math.exp %7 : vector<256x128xf32>
    %9 = math.log1p %8 : vector<256x128xf32>
    %10 = arith.addf %4, %9 : vector<256x128xf32>
    %11 = arith.mulf %1, %10 : vector<256x128xf32>
    %12 = arith.addf %0, %11 : vector<256x128xf32>
    %c0_i32 = arith.constant 0 : i32
    %13 = arith.cmpi eq, %arg2, %c0_i32 : i32
    %14 = arith.extui %13 : i1 to i32
    %c0_i32_6 = arith.constant 0 : i32
    %15 = arith.cmpi ne, %14, %c0_i32_6 : i32
    scf.if %15 {
      %c0_18 = arith.constant 0 : index
      %c0_19 = arith.constant 0 : index
      %28 = vector.load %arg8[%c0_18, %c0_19] : memref<1x128xf32, #tpu.memory_space<vmem>>, vector<1x128xf32>
      %cst_20 = arith.constant 0.000000e+00 : f32
      %29 = vector.broadcast %cst_20 : f32 to vector<1x128xf32>
      %30 = arith.maximumf %28, %29 : vector<1x128xf32>
      %31 = math.absf %28 : vector<1x128xf32>
      %cst_21 = arith.constant 0.000000e+00 : f32
      %32 = vector.broadcast %cst_21 : f32 to vector<1x128xf32>
      %33 = arith.subf %32, %31 : vector<1x128xf32>
      %34 = math.exp %33 : vector<1x128xf32>
      %35 = math.log1p %34 : vector<1x128xf32>
      %36 = arith.addf %30, %35 : vector<1x128xf32>
      %c0_22 = arith.constant 0 : index
      %c0_23 = arith.constant 0 : index
      %37 = vector.load %arg9[%c0_22, %c0_23] : memref<1x128xf32, #tpu.memory_space<vmem>>, vector<1x128xf32>
      %c0_24 = arith.constant 0 : index
      %c0_25 = arith.constant 0 : index
      %38 = vector.load %arg7[%c0_24, %c0_25] : memref<1x128xf32, #tpu.memory_space<vmem>>, vector<1x128xf32>
      %39 = arith.mulf %37, %36 : vector<1x128xf32>
      %40 = arith.addf %38, %39 : vector<1x128xf32>
      %41 = vector.shape_cast %40 : vector<1x128xf32> to vector<1x128xf32>
      %42 = vector.broadcast %41 : vector<1x128xf32> to vector<16x128xf32>
      %c0_26 = arith.constant 0 : index
      %c0_27 = arith.constant 0 : index
      %43 = vector.load %arg12[%c0_26, %c0_27] : memref<16x128xf32, #tpu.memory_space<vmem>>, vector<16x128xf32>
      tpu.vector_store %arg12[%c0_26, %c0_27], %42 {strides = array<i32>} : memref<16x128xf32, #tpu.memory_space<vmem>>, vector<16x128xf32>,
      %44 = arith.mulf %40, %40 : vector<1x128xf32>
      %45 = arith.mulf %37, %37 : vector<1x128xf32>
      %46 = arith.subf %44, %45 : vector<1x128xf32>
      %cst_28 = arith.constant 5.000000e-01 : f32
      %47 = vector.broadcast %cst_28 : f32 to vector<1x128xf32>
      %48 = arith.mulf %47, %46 : vector<1x128xf32>
      %49 = math.log %36 : vector<1x128xf32>
      %50 = arith.subf %48, %49 : vector<1x128xf32>
      %c0_i32_29 = arith.constant 0 : i32
      %51 = arith.cmpi eq, %arg0, %c0_i32_29 : i32
      %cst_30 = arith.constant 1.250000e-01 : f32
      %52 = vector.broadcast %cst_30 : f32 to vector<1x128xf32>
      %53 = arith.mulf %52, %50 : vector<1x128xf32>
      %cst_31 = arith.constant 0.000000e+00 : f32
      %54 = vector.broadcast %cst_31 : f32 to vector<1x128xf32>
      %55 = arith.select %51, %53, %54 : vector<1x128xf32>
      %56 = vector.shape_cast %55 : vector<1x128xf32> to vector<1x128xf32>
      %57 = vector.broadcast %56 : vector<1x128xf32> to vector<8x128xf32>
      %c0_32 = arith.constant 0 : index
      %c0_33 = arith.constant 0 : index
      %58 = vector.load %arg11[%c0_32, %c0_33] : memref<8x128xf32, #tpu.memory_space<vmem>>, vector<8x128xf32>
      tpu.vector_store %arg11[%c0_32, %c0_33], %57 {strides = array<i32>} : memref<8x128xf32, #tpu.memory_space<vmem>>, vector<8x128xf32>,
    } else {
    }
    %c0_7 = arith.constant 0 : index
    %c0_8 = arith.constant 0 : index
    %16 = vector.load %arg12[%c0_7, %c0_8] : memref<16x128xf32, #tpu.memory_space<vmem>>, vector<16x128xf32>
    %c0_9 = arith.constant 0 : index
    %c0_10 = arith.constant 0 : index
    %17 = vector.load %arg3[%c0_9, %c0_10] : memref<16x256xbf16, #tpu.memory_space<vmem>>, vector<16x256xbf16>
    %18 = arith.truncf %12 : vector<256x128xf32> to vector<256x128xbf16>
    %cst_11 = arith.constant dense<0.000000e+00> : vector<16x128xf32>
    %19 = tpu.matmul %17, %18, %cst_11 {dimension_numbers = #tpu.dot_dimension_numbers<[1], [0], [0], [1], [0, 0, 1, 1], [], []>} : vector<16x256xbf16>, vector<256x128xbf16>, vector<16x128xf32> -> vector<16x128xf32>
    %20 = arith.addf %16, %19 : vector<16x128xf32>
    %c0_12 = arith.constant 0 : index
    %c0_13 = arith.constant 0 : index
    %21 = vector.load %arg12[%c0_12, %c0_13] : memref<16x128xf32, #tpu.memory_space<vmem>>, vector<16x128xf32>
    tpu.vector_store %arg12[%c0_12, %c0_13], %20 {strides = array<i32>} : memref<16x128xf32, #tpu.memory_space<vmem>>, vector<16x128xf32>,
    %c0_i32_14 = arith.constant 0 : i32
    %22 = arith.cmpi eq, %arg2, %c0_i32_14 : i32
    %23 = arith.extui %22 : i1 to i32
    %c0_i32_15 = arith.constant 0 : i32
    %24 = arith.cmpi ne, %23, %c0_i32_15 : i32
    scf.if %24 {
      %c0_18 = arith.constant 0 : index
      %c0_19 = arith.constant 0 : index
      %28 = vector.load %arg12[%c0_18, %c0_19] : memref<16x128xf32, #tpu.memory_space<vmem>>, vector<16x128xf32>
      %c0_20 = arith.constant 0 : index
      %c0_21 = arith.constant 0 : index
      %29 = vector.load %arg10[%c0_20, %c0_21] : memref<16x128xf32, #tpu.memory_space<vmem>>, vector<16x128xf32>
      tpu.vector_store %arg10[%c0_20, %c0_21], %28 {strides = array<i32>} : memref<16x128xf32, #tpu.memory_space<vmem>>, vector<16x128xf32>,
    } else {
    }
    %c0_i32_16 = arith.constant 0 : i32
    %25 = arith.cmpi eq, %arg0, %c0_i32_16 : i32
    %26 = arith.extui %25 : i1 to i32
    %c0_i32_17 = arith.constant 0 : i32
    %27 = arith.cmpi ne, %26, %c0_i32_17 : i32
    scf.if %27 {
      %28 = arith.mulf %12, %12 : vector<256x128xf32>
      %29 = arith.mulf %1, %1 : vector<256x128xf32>
      %30 = arith.subf %28, %29 : vector<256x128xf32>
      %cst_18 = arith.constant 5.000000e-01 : f32
      %31 = vector.broadcast %cst_18 : f32 to vector<256x128xf32>
      %32 = arith.mulf %31, %30 : vector<256x128xf32>
      %33 = math.log %10 : vector<256x128xf32>
      %34 = arith.subf %32, %33 : vector<256x128xf32>
      %35 = vector.shape_cast %34 : vector<256x128xf32> to vector<32x8x128xf32>
      %cst_19 = arith.constant dense<0.000000e+00> : vector<8x128xf32>
      %36 = vector.multi_reduction <add>, %35, %cst_19 [0] : vector<32x8x128xf32> to vector<8x128xf32>
      %c0_20 = arith.constant 0 : index
      %c0_21 = arith.constant 0 : index
      %37 = vector.load %arg11[%c0_20, %c0_21] : memref<8x128xf32, #tpu.memory_space<vmem>>, vector<8x128xf32>
      %38 = arith.addf %37, %36 : vector<8x128xf32>
      %c0_22 = arith.constant 0 : index
      %c0_23 = arith.constant 0 : index
      %39 = vector.load %arg11[%c0_22, %c0_23] : memref<8x128xf32, #tpu.memory_space<vmem>>, vector<8x128xf32>
      tpu.vector_store %arg11[%c0_22, %c0_23], %38 {strides = array<i32>} : memref<8x128xf32, #tpu.memory_space<vmem>>, vector<8x128xf32>,
    } else {
    }
    return
  }
  func.func @transform_0(%arg0: i32, %arg1: i32, %arg2: i32) -> (i32, i32) {
    %c0_i32 = arith.constant 0 : i32
    return %arg0, %arg2 : i32, i32
  }
  func.func @transform_1(%arg0: i32, %arg1: i32, %arg2: i32) -> (i32, i32) {
    %c0_i32 = arith.constant 0 : i32
    return %arg2, %arg1 : i32, i32
  }
  func.func @transform_2(%arg0: i32, %arg1: i32, %arg2: i32) -> (i32, i32) {
    %c0_i32 = arith.constant 0 : i32
    return %arg2, %arg1 : i32, i32
  }
  func.func @transform_3(%arg0: i32, %arg1: i32, %arg2: i32) -> (i32, i32) {
    %c0_i32 = arith.constant 0 : i32
    return %arg2, %arg1 : i32, i32
  }
  func.func @transform_4(%arg0: i32, %arg1: i32, %arg2: i32) -> (i32, i32) {
    %c0_i32 = arith.constant 0 : i32
    %c0_i32_0 = arith.constant 0 : i32
    return %c0_i32, %arg1 : i32, i32
  }
  func.func @transform_5(%arg0: i32, %arg1: i32, %arg2: i32) -> (i32, i32) {
    %c0_i32 = arith.constant 0 : i32
    %c0_i32_0 = arith.constant 0 : i32
    return %c0_i32, %arg1 : i32, i32
  }
  func.func @transform_6(%arg0: i32, %arg1: i32, %arg2: i32) -> (i32, i32) {
    %c0_i32 = arith.constant 0 : i32
    %c0_i32_0 = arith.constant 0 : i32
    return %c0_i32, %arg1 : i32, i32
  }
  func.func @transform_7(%arg0: i32, %arg1: i32, %arg2: i32) -> (i32, i32) {
    %c0_i32 = arith.constant 0 : i32
    return %arg0, %arg1 : i32, i32
  }
  func.func @transform_8(%arg0: i32, %arg1: i32, %arg2: i32) -> (i32, i32) {
    %c0_i32 = arith.constant 0 : i32
    return %arg0, %arg1 : i32, i32
  }
}

</mosaic_0001>

<llo_original>
// kernel: tpu_custom_call.1
$region0: #{tpu_custom_call.1}
  #allocation0 [shape = 'u32[]', space=smem, size = 0x4, offset = 0x4, fixed_abs, tag = 'smem constant byte address 0x4 - core index']
  #allocation1 [shape = 'u32[144,128]{1,0:T(1,128)}', space=vmem, size = 0x12000, scoped, tag = 'internal scratch']
  #allocation2 [shape = 'f32[16,128]{1,0:T(8,128)}', space=vmem, size = 0x2000, scoped, tag = 'scratch operand']
  %s0 = inlined_call_operand.hbm [shape: bf16[16,256], index: 0, kind: input, shape index: {}]
  %s1 = inlined_call_operand.hbm [shape: f32[256,256], index: 1, kind: input, shape index: {}]
  %s2 = inlined_call_operand.hbm [shape: f32[256,256], index: 2, kind: input, shape index: {}]
  %s3 = inlined_call_operand.hbm [shape: f32[256,256], index: 3, kind: input, shape index: {}]
  %s4 = inlined_call_operand.vmem [shape: f32[1,256], index: 4, kind: input, shape index: {}]
  %s5 = inlined_call_operand.vmem [shape: f32[1,256], index: 5, kind: input, shape index: {}]
  %s6 = inlined_call_operand.vmem [shape: f32[1,256], index: 6, kind: input, shape index: {}]
  %s7 = inlined_call_operand.hbm [shape: f32[16,256], index: 7, kind: output, shape index: {0}]
  %s8 = inlined_call_operand.hbm [shape: f32[8,256], index: 8, kind: output, shape index: {1}]
  %9 = xla_tuple %s7, %s8
  %s10 = sld [smem:[#allocation0]]
  $region97: #{tpu_custom_call.1} parent=0
    _
  %s12 = ssub.s32 1, %s10
  %s13 = scalar_select 0, %s12, %s10
  $region1: #{tpu_custom_call.1} parent=0
    #allocation3 [shape = 'u8[8192]{0}', space=vmem, size = 0x2000, scoped, tag = 'input window, operand 0, single buffered']
    #allocation4 [shape = 's32[2]{0}', space=sflag, size = 0x8, scoped, tag = 'scoped memory for tpu_custom_call.1']
    #allocation5 [shape = 's32[2]{0}', space=sflag, size = 0x8, scoped, tag = 'scoped memory for tpu_custom_call.1']
    #allocation6 [shape = 'u8[262144]{0}', space=vmem, size = 0x40000, scoped, tag = 'input window, operand 1']
    #allocation7 [shape = 's32[2]{0}', space=sflag, size = 0x8, scoped, tag = 'scoped memory for tpu_custom_call.1']
    #allocation8 [shape = 'u8[262144]{0}', space=vmem, size = 0x40000, scoped, tag = 'input window, operand 2']
    #allocation9 [shape = 'u8[262144]{0}', space=vmem, size = 0x40000, scoped, tag = 'input window, operand 3']
    #allocation10 [shape = 's32[2]{0}', space=sflag, size = 0x8, scoped, tag = 'scoped memory for tpu_custom_call.1']
    #allocation11 [shape = 'u8[16384]{0}', space=vmem, size = 0x4000, scoped, tag = 'output window, operand 0']
    #allocation12 [shape = 'u8[8192]{0}', space=vmem, size = 0x2000, scoped, tag = 'output window, operand 1']
    #allocation13 [shape = 's32[2]{0}', space=sflag, size = 0x8, scoped, tag = 'scoped memory for tpu_custom_call.1']
    %14 = vsyncpa [#allocation4], 0
    %15 = vsyncpa [#allocation7], 0
    %s16 = scalar_lea.sflag [#allocation7], 1
    %17 = vsyncpa %s16, 0
    %18 = vsyncpa [#allocation10], 0
    %s19 = scalar_lea.sflag [#allocation10], 1
    %20 = vsyncpa %s19, 0
    %21 = vsyncpa [#allocation5], 0
    %s22 = scalar_lea.sflag [#allocation5], 1
    %23 = vsyncpa %s22, 0
    %24 = vsyncpa [#allocation13], 0
    %s25 = scalar_lea.sflag [#allocation13], 1
    %26 = vsyncpa %s25, 0
    loop: start=0, step=1, limit=4
    $region2: #{tpu_custom_call.1} parent=1 // loop_pre_header
      _
    $region3: #{tpu_custom_call.1} parent=1 // loop_header
      %s28 = sphi 0, %s32
      %p29 = scmp.ge.s32.totalorder %s28, 4
      %s35 = sphi 0, %s54
      %s36 = sphi 0, %s50
      %s37 = sphi 0, %s46
      %s38 = sphi 0, %s35
      %s39 = sphi 0, %s36
      %s40 = sphi 0, %s37
      %s41 = sphi 0, %s38
      %s42 = sphi 0, %s39
      %s43 = sphi 0, %s40
      %s59 = sphi 0, %s61
      %s62 = sphi 0, %s59
      %s63 = sphi 0, %s62
      %s79 = sphi 0, %s63
      %s87 = sphi 0, %s89
      %s90 = sphi 0, %s87
      %s91 = sphi 0, %s90
      %s107 = sphi 0, %s91
      %s115 = sphi 0, %s117
      %s118 = sphi 0, %s115
      %s119 = sphi 0, %s118
      %s135 = sphi 0, %s119
      %s143 = sphi 0, %s145
      %s146 = sphi 0, %s143
      %s147 = sphi 0, %s146
      %s163 = sphi 0, %s147
      %s169 = sphi 0, %s171
      %s172 = sphi 0, %s169
      %s173 = sphi 0, %s172
      %s189 = sphi 0, %s173
      %s195 = sphi 0, %s197
      %s198 = sphi 0, %s195
      %s199 = sphi 0, %s198
      %s215 = sphi 0, %s199
      %s221 = sphi 0, %s223
      %s224 = sphi 0, %s221
      %s225 = sphi 0, %s224
      %s241 = sphi 0, %s225
      %s249 = sphi 0, %s251
      %s252 = sphi 0, %s249
      %s253 = sphi 0, %s252
      %s269 = sphi 0, %s253
      %s277 = sphi 0, %s279
      %s280 = sphi 0, %s277
      %s281 = sphi 0, %s280
      %s297 = sphi 0, %s281
    $region4: #{tpu_custom_call.1} parent=1 // loop_header_branch
      %31 = sbr.rel (%p29) target = $region8
    $region5: #{tpu_custom_call.1} parent=1 // loop_body
      %s33 = ssub.s32 %s28, 1
      %s34 = ssub.s32 %s28, 2
      %s44 = sadd.s32 1, %s37
      %p45 = scmp.ge.s32.totalorder %s44, 1
      %s46 = scalar_select %p45, 0, %s44
      %s47 = sadd.s32 1, %s36
      %s48 = scalar_select %p45, %s47, %s36
      %p49 = scmp.ge.s32.totalorder %s48, 2
      %s50 = scalar_select %p49, 0, %s48
      %s51 = sadd.s32 1, %s35
      %s52 = scalar_select %p49, %s51, %s35
      %p53 = scmp.ge.s32.totalorder %s52, 1
      %s54 = scalar_select %p53, 0, %s52
      %s55 = ssub.s32 %s35, %s54
      %s56 = ssub.s32 %s37, %s46
      %s57 = sor.u32 %s55, %s56
      %p58 = scmp.eq.s32.totalorder %s57, 0
      %s60 = sadd.s32 %s59, 1
      %s61 = scalar_select %p58, %s59, %s60
      %p64 = pneg %p58
      %p65 = scmp.eq.s32.totalorder %s28, 1
      %p66 = por %p64, %p65
      %p67 = scmp.ne.s32.totalorder %s59, %s62
      %p68 = scmp.eq.s32.totalorder %s28, 0
      %p69 = por %p67, %p68
      %p70 = scmp.ne.s32.totalorder %s59, %s62
      %p71 = scmp.eq.s32.totalorder %s33, 1
      %p72 = por %p70, %p71
      %p73 = scmp.ne.s32.totalorder %s62, %s63
      %p74 = scmp.eq.s32.totalorder %s33, 0
      %p75 = por %p73, %p74
      %p76 = scmp.ne.s32.totalorder %s62, %s63
      %p77 = scmp.eq.s32.totalorder %s34, 1
      %p78 = por %p76, %p77
      %p80 = scmp.ne.s32.totalorder %s63, %s79
      %p81 = scmp.eq.s32.totalorder %s34, 0
      %p82 = por %p80, %p81
      %s83 = ssub.s32 %s37, %s46
      %s84 = ssub.s32 %s36, %s50
      %s85 = sor.u32 %s83, %s84
      %p86 = scmp.eq.s32.totalorder %s85, 0
      %s88 = sadd.s32 %s87, 1
      %s89 = scalar_select %p86, %s87, %s88
      %p92 = pneg %p86
      %p93 = scmp.eq.s32.totalorder %s28, 1
      %p94 = por %p92, %p93
      %p95 = scmp.ne.s32.totalorder %s87, %s90
      %p96 = scmp.eq.s32.totalorder %s28, 0
      %p97 = por %p95, %p96
      %p98 = scmp.ne.s32.totalorder %s87, %s90
      %p99 = scmp.eq.s32.totalorder %s33, 1
      %p100 = por %p98, %p99
      %p101 = scmp.ne.s32.totalorder %s90, %s91
      %p102 = scmp.eq.s32.totalorder %s33, 0
      %p103 = por %p101, %p102
      %p104 = scmp.ne.s32.totalorder %s90, %s91
      %p105 = scmp.eq.s32.totalorder %s34, 1
      %p106 = por %p104, %p105
      %p108 = scmp.ne.s32.totalorder %s91, %s107
      %p109 = scmp.eq.s32.totalorder %s34, 0
      %p110 = por %p108, %p109
      %s111 = ssub.s32 %s37, %s46
      %s112 = ssub.s32 %s36, %s50
      %s113 = sor.u32 %s111, %s112
      %p114 = scmp.eq.s32.totalorder %s113, 0
      %s116 = sadd.s32 %s115, 1
      %s117 = scalar_select %p114, %s115, %s116
      %p120 = pneg %p114
      %p121 = scmp.eq.s32.totalorder %s28, 1
      %p122 = por %p120, %p121
      %p123 = scmp.ne.s32.totalorder %s115, %s118
      %p124 = scmp.eq.s32.totalorder %s28, 0
      %p125 = por %p123, %p124
      %p126 = scmp.ne.s32.totalorder %s115, %s118
      %p127 = scmp.eq.s32.totalorder %s33, 1
      %p128 = por %p126, %p127
      %p129 = scmp.ne.s32.totalorder %s118, %s119
      %p130 = scmp.eq.s32.totalorder %s33, 0
      %p131 = por %p129, %p130
      %p132 = scmp.ne.s32.totalorder %s118, %s119
      %p133 = scmp.eq.s32.totalorder %s34, 1
      %p134 = por %p132, %p133
      %p136 = scmp.ne.s32.totalorder %s119, %s135
      %p137 = scmp.eq.s32.totalorder %s34, 0
      %p138 = por %p136, %p137
      %s139 = ssub.s32 %s37, %s46
      %s140 = ssub.s32 %s36, %s50
      %s141 = sor.u32 %s139, %s140
      %p142 = scmp.eq.s32.totalorder %s141, 0
      %s144 = sadd.s32 %s143, 1
      %s145 = scalar_select %p142, %s143, %s144
      %p148 = pneg %p142
      %p149 = scmp.eq.s32.totalorder %s28, 1
      %p150 = por %p148, %p149
      %p151 = scmp.ne.s32.totalorder %s143, %s146
      %p152 = scmp.eq.s32.totalorder %s28, 0
      %p153 = por %p151, %p152
      %p154 = scmp.ne.s32.totalorder %s143, %s146
      %p155 = scmp.eq.s32.totalorder %s33, 1
      %p156 = por %p154, %p155
      %p157 = scmp.ne.s32.totalorder %s146, %s147
      %p158 = scmp.eq.s32.totalorder %s33, 0
      %p159 = por %p157, %p158
      %p160 = scmp.ne.s32.totalorder %s146, %s147
      %p161 = scmp.eq.s32.totalorder %s34, 1
      %p162 = por %p160, %p161
      %p164 = scmp.ne.s32.totalorder %s147, %s163
      %p165 = scmp.eq.s32.totalorder %s34, 0
      %p166 = por %p164, %p165
      %s167 = ssub.s32 %s36, %s50
      %p168 = scmp.eq.s32.totalorder %s167, 0
      %s170 = sadd.s32 %s169, 1
      %s171 = scalar_select %p168, %s169, %s170
      %p174 = pneg %p168
      %p175 = scmp.eq.s32.totalorder %s28, 1
      %p176 = por %p174, %p175
      %p177 = scmp.ne.s32.totalorder %s169, %s172
      %p178 = scmp.eq.s32.totalorder %s28, 0
      %p179 = por %p177, %p178
      %p180 = scmp.ne.s32.totalorder %s169, %s172
      %p181 = scmp.eq.s32.totalorder %s33, 1
      %p182 = por %p180, %p181
      %p183 = scmp.ne.s32.totalorder %s172, %s173
      %p184 = scmp.eq.s32.totalorder %s33, 0
      %p185 = por %p183, %p184
      %p186 = scmp.ne.s32.totalorder %s172, %s173
      %p187 = scmp.eq.s32.totalorder %s34, 1
      %p188 = por %p186, %p187
      %p190 = scmp.ne.s32.totalorder %s173, %s189
      %p191 = scmp.eq.s32.totalorder %s34, 0
      %p192 = por %p190, %p191
      %s193 = ssub.s32 %s36, %s50
      %p194 = scmp.eq.s32.totalorder %s193, 0
      %s196 = sadd.s32 %s195, 1
      %s197 = scalar_select %p194, %s195, %s196
      %p200 = pneg %p194
      %p201 = scmp.eq.s32.totalorder %s28, 1
      %p202 = por %p200, %p201
      %p203 = scmp.ne.s32.totalorder %s195, %s198
      %p204 = scmp.eq.s32.totalorder %s28, 0
      %p205 = por %p203, %p204
      %p206 = scmp.ne.s32.totalorder %s195, %s198
      %p207 = scmp.eq.s32.totalorder %s33, 1
      %p208 = por %p206, %p207
      %p209 = scmp.ne.s32.totalorder %s198, %s199
      %p210 = scmp.eq.s32.totalorder %s33, 0
      %p211 = por %p209, %p210
      %p212 = scmp.ne.s32.totalorder %s198, %s199
      %p213 = scmp.eq.s32.totalorder %s34, 1
      %p214 = por %p212, %p213
      %p216 = scmp.ne.s32.totalorder %s199, %s215
      %p217 = scmp.eq.s32.totalorder %s34, 0
      %p218 = por %p216, %p217
      %s219 = ssub.s32 %s36, %s50
      %p220 = scmp.eq.s32.totalorder %s219, 0
      %s222 = sadd.s32 %s221, 1
      %s223 = scalar_select %p220, %s221, %s222
      %p226 = pneg %p220
      %p227 = scmp.eq.s32.totalorder %s28, 1
      %p228 = por %p226, %p227
      %p229 = scmp.ne.s32.totalorder %s221, %s224
      %p230 = scmp.eq.s32.totalorder %s28, 0
      %p231 = por %p229, %p230
      %p232 = scmp.ne.s32.totalorder %s221, %s224
      %p233 = scmp.eq.s32.totalorder %s33, 1
      %p234 = por %p232, %p233
      %p235 = scmp.ne.s32.totalorder %s224, %s225
      %p236 = scmp.eq.s32.totalorder %s33, 0
      %p237 = por %p235, %p236
      %p238 = scmp.ne.s32.totalorder %s224, %s225
      %p239 = scmp.eq.s32.totalorder %s34, 1
      %p240 = por %p238, %p239
      %p242 = scmp.ne.s32.totalorder %s225, %s241
      %p243 = scmp.eq.s32.totalorder %s34, 0
      %p244 = por %p242, %p243
      %s245 = ssub.s32 %s35, %s54
      %s246 = ssub.s32 %s36, %s50
      %s247 = sor.u32 %s245, %s246
      %p248 = scmp.eq.s32.totalorder %s247, 0
      %s250 = sadd.s32 %s249, 1
      %s251 = scalar_select %p248, %s249, %s250
      %p254 = pneg %p248
      %p255 = scmp.eq.s32.totalorder %s28, 1
      %p256 = por %p254, %p255
      %p257 = scmp.ne.s32.totalorder %s249, %s252
      %p258 = scmp.eq.s32.totalorder %s28, 0
      %p259 = por %p257, %p258
      %p260 = scmp.ne.s32.totalorder %s249, %s252
      %p261 = scmp.eq.s32.totalorder %s33, 1
      %p262 = por %p260, %p261
      %p263 = scmp.ne.s32.totalorder %s252, %s253
      %p264 = scmp.eq.s32.totalorder %s33, 0
      %p265 = por %p263, %p264
      %p266 = scmp.ne.s32.totalorder %s252, %s253
      %p267 = scmp.eq.s32.totalorder %s34, 1
      %p268 = por %p266, %p267
      %p270 = scmp.ne.s32.totalorder %s253, %s269
      %p271 = scmp.eq.s32.totalorder %s34, 0
      %p272 = por %p270, %p271
      %s273 = ssub.s32 %s35, %s54
      %s274 = ssub.s32 %s36, %s50
      %s275 = sor.u32 %s273, %s274
      %p276 = scmp.eq.s32.totalorder %s275, 0
      %s278 = sadd.s32 %s277, 1
      %s279 = scalar_select %p276, %s277, %s278
      %p282 = pneg %p276
      %p283 = scmp.eq.s32.totalorder %s28, 1
      %p284 = por %p282, %p283
      %p285 = scmp.ne.s32.totalorder %s277, %s280
      %p286 = scmp.eq.s32.totalorder %s28, 0
      %p287 = por %p285, %p286
      %p288 = scmp.ne.s32.totalorder %s277, %s280
      %p289 = scmp.eq.s32.totalorder %s33, 1
      %p290 = por %p288, %p289
      %p291 = scmp.ne.s32.totalorder %s280, %s281
      %p292 = scmp.eq.s32.totalorder %s33, 0
      %p293 = por %p291, %p292
      %p294 = scmp.ne.s32.totalorder %s280, %s281
      %p295 = scmp.eq.s32.totalorder %s34, 1
      %p296 = por %p294, %p295
      %p298 = scmp.ne.s32.totalorder %s281, %s297
      %p299 = scmp.eq.s32.totalorder %s34, 0
      %p300 = por %p298, %p299
      %p301 = scmp.le.s32.totalorder 1, %s28
      %p302 = scmp.lt.s32.totalorder %s28, 3
      %p303 = pnand %p301, %p302
      %p304 = pneg %p303
      // Predicated region
      $region9: #{tpu_custom_call.1} parent=5 // pred_check
        _
      $region10: #{tpu_custom_call.1} parent=5 // pred_check_branch
        %306 = sbr.rel (%p303) target = $region12
      $region11: #{tpu_custom_call.1} parent=5 // pred_region
        %s307 = ssub.s32 %s28, 1
        // Predicated region
        $region13: #{tpu_custom_call.1} parent=11 // pred_check
          %p308 = pneg %p75
        $region14: #{tpu_custom_call.1} parent=11 // pred_check_branch
          %310 = sbr.rel (%p308) target = $region16
        $region15: #{tpu_custom_call.1} parent=11 // pred_region
          %s311 = smul.u32 2, %s38
          %s312 = smul.u32 2, %s40
          %s314 = ssub.s32 256, 256
          %315 = vsyncadd [#allocation4], %s314
          %s316 = smul.addr %s311, 2
          %s317 = sadd.s32 %s312, %s316
          %s318 = smul.addr %s317, 64
          %s319 = scalar_lea.hbm %s0, %s318
          %s320 = sshll.u32 [#allocation3], 4
          %s321 = int_to_ptr.vmem [resolvable:$true] %s320
          %326 = dma.hbm_to_vmem [thread:$0]  %s319, 256, %s321, [#allocation4], 128, 128, 8
        $region16: #{tpu_custom_call.1} parent=11 // pred_fallthru
          _
      $region12: #{tpu_custom_call.1} parent=5 // pred_fallthru
        _
      %p327 = scmp.lt.s32.totalorder %s28, 2
      // Predicated region
      $region17: #{tpu_custom_call.1} parent=5 // pred_check
        %p328 = pneg %p327
      $region18: #{tpu_custom_call.1} parent=5 // pred_check_branch
        %330 = sbr.rel (%p328) target = $region20
      $region19: #{tpu_custom_call.1} parent=5 // pred_region
        // Predicated region
        $region21: #{tpu_custom_call.1} parent=19 // pred_check
          %p331 = pneg %p97
        $region22: #{tpu_custom_call.1} parent=19 // pred_check_branch
          %333 = sbr.rel (%p331) target = $region24
        $region23: #{tpu_custom_call.1} parent=19 // pred_region
          %s334 = sand.u32 %s28, 1
          %s335 = scalar_lea.sflag [#allocation7], %s334
          %s336 = sand.u32 %s87, 1
          %s337 = smul.addr %s336, 256
          %s338 = scalar_lea.vmem [#allocation6], %s337
          %s339 = smul.u32 32, %s37
          %s341 = ssub.s32 4096, 4096
          %342 = vsyncadd %s335, %s341
          %s343 = smul.addr %s339, 2
          %s344 = sadd.s32 %s36, %s343
          %s345 = smul.addr %s344, 128
          %s346 = scalar_lea.hbm %s1, %s345
          %s347 = sshll.u32 %s338, 4
          %s348 = int_to_ptr.vmem [resolvable:$true] %s347
          %353 = dma.hbm_to_vmem [thread:$0]  %s346, 4096, %s348, %s335, 256, 128, 8
        $region24: #{tpu_custom_call.1} parent=19 // pred_fallthru
          _
        // Predicated region
        $region25: #{tpu_custom_call.1} parent=19 // pred_check
          %p354 = pneg %p125
        $region26: #{tpu_custom_call.1} parent=19 // pred_check_branch
          %356 = sbr.rel (%p354) target = $region28
        $region27: #{tpu_custom_call.1} parent=19 // pred_region
          %s357 = sand.u32 %s28, 1
          %s358 = scalar_lea.sflag [#allocation7], %s357
          %s359 = sand.u32 %s115, 1
          %s360 = smul.addr %s359, 256
          %s361 = scalar_lea.vmem [#allocation8], %s360
          %s362 = smul.u32 32, %s37
          %s364 = ssub.s32 4096, 4096
          %365 = vsyncadd %s358, %s364
          %s366 = smul.addr %s362, 2
          %s367 = sadd.s32 %s36, %s366
          %s368 = smul.addr %s367, 128
          %s369 = scalar_lea.hbm %s2, %s368
          %s370 = sshll.u32 %s361, 4
          %s371 = int_to_ptr.vmem [resolvable:$true] %s370
          %376 = dma.hbm_to_vmem [thread:$0]  %s369, 4096, %s371, %s358, 256, 128, 8
        $region28: #{tpu_custom_call.1} parent=19 // pred_fallthru
          _
        // Predicated region
        $region29: #{tpu_custom_call.1} parent=19 // pred_check
          %p377 = pneg %p153
        $region30: #{tpu_custom_call.1} parent=19 // pred_check_branch
          %379 = sbr.rel (%p377) target = $region32
        $region31: #{tpu_custom_call.1} parent=19 // pred_region
          %s380 = sand.u32 %s143, 1
          %s381 = scalar_lea.sflag [#allocation10], %s380
          %s382 = sand.u32 %s143, 1
          %s383 = smul.addr %s382, 256
          %s384 = scalar_lea.vmem [#allocation9], %s383
          %s385 = smul.u32 32, %s37
          %s387 = ssub.s32 4096, 4096
          %388 = vsyncadd %s381, %s387
          %s389 = smul.addr %s385, 2
          %s390 = sadd.s32 %s36, %s389
          %s391 = smul.addr %s390, 128
          %s392 = scalar_lea.hbm %s3, %s391
          %s393 = sshll.u32 %s384, 4
          %s394 = int_to_ptr.vmem [resolvable:$true] %s393
          %399 = dma.hbm_to_vmem [thread:$0]  %s392, 4096, %s394, %s381, 256, 128, 8
        $region32: #{tpu_custom_call.1} parent=19 // pred_fallthru
          _
        // Predicated region
        $region33: #{tpu_custom_call.1} parent=19 // pred_check
          %p400 = pneg %p179
        $region34: #{tpu_custom_call.1} parent=19 // pred_check_branch
          %402 = sbr.rel (%p400) target = $region36
        $region35: #{tpu_custom_call.1} parent=19 // pred_region
          %p403 = scmp.lt.s32.totalorder %s36, 1
          %s404 = scalar_select %p403, %s36, 1
          %s405 = scalar_lea.vmem %s4, %s404
        $region36: #{tpu_custom_call.1} parent=19 // pred_fallthru
          _
        // Predicated region
        $region37: #{tpu_custom_call.1} parent=19 // pred_check
          %p406 = pneg %p205
        $region38: #{tpu_custom_call.1} parent=19 // pred_check_branch
          %408 = sbr.rel (%p406) target = $region40
        $region39: #{tpu_custom_call.1} parent=19 // pred_region
          %p409 = scmp.lt.s32.totalorder %s36, 1
          %s410 = scalar_select %p409, %s36, 1
          %s411 = scalar_lea.vmem %s5, %s410
        $region40: #{tpu_custom_call.1} parent=19 // pred_fallthru
          _
        // Predicated region
        $region41: #{tpu_custom_call.1} parent=19 // pred_check
          %p412 = pneg %p231
        $region42: #{tpu_custom_call.1} parent=19 // pred_check_branch
          %414 = sbr.rel (%p412) target = $region44
        $region43: #{tpu_custom_call.1} parent=19 // pred_region
          %p415 = scmp.lt.s32.totalorder %s36, 1
          %s416 = scalar_select %p415, %s36, 1
          %s417 = scalar_lea.vmem %s6, %s416
        $region44: #{tpu_custom_call.1} parent=19 // pred_fallthru
          _
      $region20: #{tpu_custom_call.1} parent=5 // pred_fallthru
        _
      %p418 = scmp.le.s32.totalorder 1, %s28
      %p419 = scmp.lt.s32.totalorder %s28, 3
      %p420 = pnand %p418, %p419
      %p421 = pneg %p420
      // Predicated region
      $region45: #{tpu_custom_call.1} parent=5 // pred_check
        _
      $region46: #{tpu_custom_call.1} parent=5 // pred_check_branch
        %423 = sbr.rel (%p420) target = $region48
      $region47: #{tpu_custom_call.1} parent=5 // pred_region
        %s424 = ssub.s32 %s28, 1
        // Predicated region
        $region49: #{tpu_custom_call.1} parent=47 // pred_check
          %p425 = pneg %p75
        $region50: #{tpu_custom_call.1} parent=47 // pred_check_branch
          %427 = sbr.rel (%p425) target = $region52
        $region51: #{tpu_custom_call.1} parent=47 // pred_region
          %428 = dma.done [#allocation4], 256
        $region52: #{tpu_custom_call.1} parent=47 // pred_fallthru
          _
        %s429 = sand.u32 %s33, 1
        %s430 = scalar_lea.sflag [#allocation7], %s429
        %s431 = sand.u32 %s90, 1
        %s432 = smul.addr %s431, 256
        %s433 = scalar_lea.vmem [#allocation6], %s432
        // Predicated region
        $region53: #{tpu_custom_call.1} parent=47 // pred_check
          %p434 = pneg %p103
        $region54: #{tpu_custom_call.1} parent=47 // pred_check_branch
          %436 = sbr.rel (%p434) target = $region56
        $region55: #{tpu_custom_call.1} parent=47 // pred_region
          %437 = dma.done %s430, 4096
        $region56: #{tpu_custom_call.1} parent=47 // pred_fallthru
          _
        %s438 = sand.u32 %s33, 1
        %s439 = scalar_lea.sflag [#allocation7], %s438
        %s440 = sand.u32 %s118, 1
        %s441 = smul.addr %s440, 256
        %s442 = scalar_lea.vmem [#allocation8], %s441
        // Predicated region
        $region57: #{tpu_custom_call.1} parent=47 // pred_check
          %p443 = pneg %p131
        $region58: #{tpu_custom_call.1} parent=47 // pred_check_branch
          %445 = sbr.rel (%p443) target = $region60
        $region59: #{tpu_custom_call.1} parent=47 // pred_region
          %446 = dma.done %s439, 4096
        $region60: #{tpu_custom_call.1} parent=47 // pred_fallthru
          _
        %s447 = sand.u32 %s146, 1
        %s448 = scalar_lea.sflag [#allocation10], %s447
        %s449 = sand.u32 %s146, 1
        %s450 = smul.addr %s449, 256
        %s451 = scalar_lea.vmem [#allocation9], %s450
        // Predicated region
        $region61: #{tpu_custom_call.1} parent=47 // pred_check
          %p452 = pneg %p159
        $region62: #{tpu_custom_call.1} parent=47 // pred_check_branch
          %454 = sbr.rel (%p452) target = $region64
        $region63: #{tpu_custom_call.1} parent=47 // pred_region
          %455 = dma.done %s448, 4096
        $region64: #{tpu_custom_call.1} parent=47 // pred_fallthru
          _
        %p456 = pneg %p75
        %p457 = pneg %p72
        %s458 = sand.u32 %s33, 1
        %s459 = scalar_lea.sflag [#allocation7], %s458
        %s460 = sand.u32 %s90, 1
        %s461 = smul.addr %s460, 256
        %s462 = scalar_lea.vmem [#allocation6], %s461
        %p463 = pneg %p103
        %p464 = pneg %p100
        %s465 = sand.u32 %s33, 1
        %s466 = scalar_lea.sflag [#allocation7], %s465
        %s467 = sand.u32 %s118, 1
        %s468 = smul.addr %s467, 256
        %s469 = scalar_lea.vmem [#allocation8], %s468
        %p470 = pneg %p131
        %p471 = pneg %p128
        %s472 = sand.u32 %s146, 1
        %s473 = scalar_lea.sflag [#allocation10], %s472
        %s474 = sand.u32 %s146, 1
        %s475 = smul.addr %s474, 256
        %s476 = scalar_lea.vmem [#allocation9], %s475
        %p477 = pneg %p159
        %p478 = pneg %p156
        %p479 = scmp.lt.s32.totalorder %s39, 1
        %s480 = scalar_select %p479, %s39, 1
        %s481 = scalar_lea.vmem %s4, %s480
        %p482 = pneg %p185
        %p483 = pneg %p182
        %p484 = scmp.lt.s32.totalorder %s39, 1
        %s485 = scalar_select %p484, %s39, 1
        %s486 = scalar_lea.vmem %s5, %s485
        %p487 = pneg %p211
        %p488 = pneg %p208
        %p489 = scmp.lt.s32.totalorder %s39, 1
        %s490 = scalar_select %p489, %s39, 1
        %s491 = scalar_lea.vmem %s6, %s490
        %p492 = pneg %p237
        %p493 = pneg %p234
        %p494 = pneg %p265
        %p495 = pneg %p262
        %s496 = sand.u32 %s252, 1
        %s497 = scalar_lea.sflag [#allocation5], %s496
        %s498 = sand.u32 %s252, 1
        %s499 = smul.addr %s498, 16
        %s500 = scalar_lea.vmem [#allocation11], %s499
        %p501 = pneg %p293
        %p502 = pneg %p290
        %s503 = sand.u32 %s280, 1
        %s504 = scalar_lea.sflag [#allocation13], %s503
        %s505 = sand.u32 %s280, 1
        %s506 = smul.addr %s505, 8
        %s507 = scalar_lea.vmem [#allocation12], %s506
        %s508 = smul.u32 2, %s38
        %s509 = smul.u32 2, %s40
        %s510 = smul.u32 32, %s40
        %s511 = smul.u32 32, %s40
        %s512 = smul.u32 32, %s40
        %p513 = scmp.lt.s32.totalorder %s39, 1
        %s514 = scalar_select %p513, %s39, 1
        %s515 = scalar_lea.vmem %s4, %s514
        %p516 = scmp.lt.s32.totalorder %s39, 1
        %s517 = scalar_select %p516, %s39, 1
        %s518 = scalar_lea.vmem %s5, %s517
        %p519 = scmp.lt.s32.totalorder %s39, 1
        %s520 = scalar_select %p519, %s39, 1
        %s521 = scalar_lea.vmem %s6, %s520
        %s522 = smul.u32 2, %s38
        %v524 = vld [vmem:[%s433] sm:$0xff]
        %v525 = vld [vmem:[%s433 + $0x8] sm:$0xff]
        %v526 = vld [vmem:[%s433 + $0x10] sm:$0xff]
        %v527 = vld [vmem:[%s433 + $0x18] sm:$0xff]
        %v528 = vld [vmem:[%s433 + $0x20] sm:$0xff]
        %v529 = vld [vmem:[%s433 + $0x28] sm:$0xff]
        %v530 = vld [vmem:[%s433 + $0x30] sm:$0xff]
        %v531 = vld [vmem:[%s433 + $0x38] sm:$0xff]
        %v532 = vld [vmem:[%s433 + $0x40] sm:$0xff]
        %v533 = vld [vmem:[%s433 + $0x48] sm:$0xff]
        %v534 = vld [vmem:[%s433 + $0x50] sm:$0xff]
        %v535 = vld [vmem:[%s433 + $0x58] sm:$0xff]
        %v536 = vld [vmem:[%s433 + $0x60] sm:$0xff]
        %v537 = vld [vmem:[%s433 + $0x68] sm:$0xff]
        %v538 = vld [vmem:[%s433 + $0x70] sm:$0xff]
        %v539 = vld [vmem:[%s433 + $0x78] sm:$0xff]
        %v540 = vld [vmem:[%s433 + $0x80] sm:$0xff]
        %v541 = vld [vmem:[%s433 + $0x88] sm:$0xff]
        %v542 = vld [vmem:[%s433 + $0x90] sm:$0xff]
        %v543 = vld [vmem:[%s433 + $0x98] sm:$0xff]
        %v544 = vld [vmem:[%s433 + $0xa0] sm:$0xff]
        %v545 = vld [vmem:[%s433 + $0xa8] sm:$0xff]
        %v546 = vld [vmem:[%s433 + $0xb0] sm:$0xff]
        %v547 = vld [vmem:[%s433 + $0xb8] sm:$0xff]
        %v548 = vld [vmem:[%s433 + $0xc0] sm:$0xff]
        %v549 = vld [vmem:[%s433 + $0xc8] sm:$0xff]
        %v550 = vld [vmem:[%s433 + $0xd0] sm:$0xff]
        %v551 = vld [vmem:[%s433 + $0xd8] sm:$0xff]
        %v552 = vld [vmem:[%s433 + $0xe0] sm:$0xff]
        %v553 = vld [vmem:[%s433 + $0xe8] sm:$0xff]
        %v554 = vld [vmem:[%s433 + $0xf0] sm:$0xff]
        %v555 = vld [vmem:[%s433 + $0xf8] sm:$0xff]
        %v556 = vld [vmem:[%s451] sm:$0xff]
        %v557 = vld [vmem:[%s451 + $0x8] sm:$0xff]
        %v558 = vld [vmem:[%s451 + $0x10] sm:$0xff]
        %v559 = vld [vmem:[%s451 + $0x18] sm:$0xff]
        %v560 = vld [vmem:[%s451 + $0x20] sm:$0xff]
        %v561 = vld [vmem:[%s451 + $0x28] sm:$0xff]
        %v562 = vld [vmem:[%s451 + $0x30] sm:$0xff]
        %v563 = vld [vmem:[%s451 + $0x38] sm:$0xff]
        %v564 = vld [vmem:[%s451 + $0x40] sm:$0xff]
        %v565 = vld [vmem:[%s451 + $0x48] sm:$0xff]
        %v566 = vld [vmem:[%s451 + $0x50] sm:$0xff]
        %v567 = vld [vmem:[%s451 + $0x58] sm:$0xff]
        %v568 = vld [vmem:[%s451 + $0x60] sm:$0xff]
        %v569 = vld [vmem:[%s451 + $0x68] sm:$0xff]
        %v570 = vld [vmem:[%s451 + $0x70] sm:$0xff]
        %v571 = vld [vmem:[%s451 + $0x78] sm:$0xff]
        %v572 = vld [vmem:[%s451 + $0x80] sm:$0xff]
        %v573 = vld [vmem:[%s451 + $0x88] sm:$0xff]
        %v574 = vld [vmem:[%s451 + $0x90] sm:$0xff]
        %v575 = vld [vmem:[%s451 + $0x98] sm:$0xff]
        %v576 = vld [vmem:[%s451 + $0xa0] sm:$0xff]
        %v577 = vld [vmem:[%s451 + $0xa8] sm:$0xff]
        %v578 = vld [vmem:[%s451 + $0xb0] sm:$0xff]
        %v579 = vld [vmem:[%s451 + $0xb8] sm:$0xff]
        %v580 = vld [vmem:[%s451 + $0xc0] sm:$0xff]
        %v581 = vld [vmem:[%s451 + $0xc8] sm:$0xff]
        %v582 = vld [vmem:[%s451 + $0xd0] sm:$0xff]
        %v583 = vld [vmem:[%s451 + $0xd8] sm:$0xff]
        %v584 = vld [vmem:[%s451 + $0xe0] sm:$0xff]
        %v585 = vld [vmem:[%s451 + $0xe8] sm:$0xff]
        %v586 = vld [vmem:[%s451 + $0xf0] sm:$0xff]
        %v587 = vld [vmem:[%s451 + $0xf8] sm:$0xff]
        %v588 = vld [vmem:[%s442] sm:$0xff]
        %v589 = vld [vmem:[%s442 + $0x8] sm:$0xff]
        %v590 = vld [vmem:[%s442 + $0x10] sm:$0xff]
        %v591 = vld [vmem:[%s442 + $0x18] sm:$0xff]
        %v592 = vld [vmem:[%s442 + $0x20] sm:$0xff]
        %v593 = vld [vmem:[%s442 + $0x28] sm:$0xff]
        %v594 = vld [vmem:[%s442 + $0x30] sm:$0xff]
        %v595 = vld [vmem:[%s442 + $0x38] sm:$0xff]
        %v596 = vld [vmem:[%s442 + $0x40] sm:$0xff]
        %v597 = vld [vmem:[%s442 + $0x48] sm:$0xff]
        %v598 = vld [vmem:[%s442 + $0x50] sm:$0xff]
        %v599 = vld [vmem:[%s442 + $0x58] sm:$0xff]
        %v600 = vld [vmem:[%s442 + $0x60] sm:$0xff]
        %v601 = vld [vmem:[%s442 + $0x68] sm:$0xff]
        %v602 = vld [vmem:[%s442 + $0x70] sm:$0xff]
        %v603 = vld [vmem:[%s442 + $0x78] sm:$0xff]
        %v604 = vld [vmem:[%s442 + $0x80] sm:$0xff]
        %v605 = vld [vmem:[%s442 + $0x88] sm:$0xff]
        %v606 = vld [vmem:[%s442 + $0x90] sm:$0xff]
        %v607 = vld [vmem:[%s442 + $0x98] sm:$0xff]
        %v608 = vld [vmem:[%s442 + $0xa0] sm:$0xff]
        %v609 = vld [vmem:[%s442 + $0xa8] sm:$0xff]
        %v610 = vld [vmem:[%s442 + $0xb0] sm:$0xff]
        %v611 = vld [vmem:[%s442 + $0xb8] sm:$0xff]
        %v612 = vld [vmem:[%s442 + $0xc0] sm:$0xff]
        %v613 = vld [vmem:[%s442 + $0xc8] sm:$0xff]
        %v614 = vld [vmem:[%s442 + $0xd0] sm:$0xff]
        %v615 = vld [vmem:[%s442 + $0xd8] sm:$0xff]
        %v616 = vld [vmem:[%s442 + $0xe0] sm:$0xff]
        %v617 = vld [vmem:[%s442 + $0xe8] sm:$0xff]
        %v618 = vld [vmem:[%s442 + $0xf0] sm:$0xff]
        %v619 = vld [vmem:[%s442 + $0xf8] sm:$0xff]
        %v620 = vmax.f32 %v588, 0.0
        %v621 = vmax.f32 %v589, 0.0
        %v622 = vmax.f32 %v590, 0.0
        %v623 = vmax.f32 %v591, 0.0
        %v624 = vmax.f32 %v592, 0.0
        %v625 = vmax.f32 %v593, 0.0
        %v626 = vmax.f32 %v594, 0.0
        %v627 = vmax.f32 %v595, 0.0
        %v628 = vmax.f32 %v596, 0.0
        %v629 = vmax.f32 %v597, 0.0
        %v630 = vmax.f32 %v598, 0.0
        %v631 = vmax.f32 %v599, 0.0
        %v632 = vmax.f32 %v600, 0.0
        %v633 = vmax.f32 %v601, 0.0
        %v634 = vmax.f32 %v602, 0.0
        %v635 = vmax.f32 %v603, 0.0
        %v636 = vmax.f32 %v604, 0.0
        %v637 = vmax.f32 %v605, 0.0
        %v638 = vmax.f32 %v606, 0.0
        %v639 = vmax.f32 %v607, 0.0
        %v640 = vmax.f32 %v608, 0.0
        %v641 = vmax.f32 %v609, 0.0
        %v642 = vmax.f32 %v610, 0.0
        %v643 = vmax.f32 %v611, 0.0
        %v644 = vmax.f32 %v612, 0.0
        %v645 = vmax.f32 %v613, 0.0
        %v646 = vmax.f32 %v614, 0.0
        %v647 = vmax.f32 %v615, 0.0
        %v648 = vmax.f32 %v616, 0.0
        %v649 = vmax.f32 %v617, 0.0
        %v650 = vmax.f32 %v618, 0.0
        %v651 = vmax.f32 %v619, 0.0
        %v652 = vand.u32 2147483647, %v588
        %v653 = vand.u32 2147483647, %v589
        %v654 = vand.u32 2147483647, %v590
        %v655 = vand.u32 2147483647, %v591
        %v656 = vand.u32 2147483647, %v592
        %v657 = vand.u32 2147483647, %v593
        %v658 = vand.u32 2147483647, %v594
        %v659 = vand.u32 2147483647, %v595
        %v660 = vand.u32 2147483647, %v596
        %v661 = vand.u32 2147483647, %v597
        %v662 = vand.u32 2147483647, %v598
        %v663 = vand.u32 2147483647, %v599
        %v664 = vand.u32 2147483647, %v600
        %v665 = vand.u32 2147483647, %v601
        %v666 = vand.u32 2147483647, %v602
        %v667 = vand.u32 2147483647, %v603
        %v668 = vand.u32 2147483647, %v604
        %v669 = vand.u32 2147483647, %v605
        %v670 = vand.u32 2147483647, %v606
        %v671 = vand.u32 2147483647, %v607
        %v672 = vand.u32 2147483647, %v608
        %v673 = vand.u32 2147483647, %v609
        %v674 = vand.u32 2147483647, %v610
        %v675 = vand.u32 2147483647, %v611
        %v676 = vand.u32 2147483647, %v612
        %v677 = vand.u32 2147483647, %v613
        %v678 = vand.u32 2147483647, %v614
        %v679 = vand.u32 2147483647, %v615
        %v680 = vand.u32 2147483647, %v616
        %v681 = vand.u32 2147483647, %v617
        %v682 = vand.u32 2147483647, %v618
        %v683 = vand.u32 2147483647, %v619
        %v684 = vsub.f32 0.0, %v652
        %v685 = vsub.f32 0.0, %v653
        %v686 = vsub.f32 0.0, %v654
        %v687 = vsub.f32 0.0, %v655
        %v688 = vsub.f32 0.0, %v656
        %v689 = vsub.f32 0.0, %v657
        %v690 = vsub.f32 0.0, %v658
        %v691 = vsub.f32 0.0, %v659
        %v692 = vsub.f32 0.0, %v660
        %v693 = vsub.f32 0.0, %v661
        %v694 = vsub.f32 0.0, %v662
        %v695 = vsub.f32 0.0, %v663
        %v696 = vsub.f32 0.0, %v664
        %v697 = vsub.f32 0.0, %v665
        %v698 = vsub.f32 0.0, %v666
        %v699 = vsub.f32 0.0, %v667
        %v700 = vsub.f32 0.0, %v668
        %v701 = vsub.f32 0.0, %v669
        %v702 = vsub.f32 0.0, %v670
        %v703 = vsub.f32 0.0, %v671
        %v704 = vsub.f32 0.0, %v672
        %v705 = vsub.f32 0.0, %v673
        %v706 = vsub.f32 0.0, %v674
        %v707 = vsub.f32 0.0, %v675
        %v708 = vsub.f32 0.0, %v676
        %v709 = vsub.f32 0.0, %v677
        %v710 = vsub.f32 0.0, %v678
        %v711 = vsub.f32 0.0, %v679
        %v712 = vsub.f32 0.0, %v680
        %v713 = vsub.f32 0.0, %v681
        %v714 = vsub.f32 0.0, %v682
        %v715 = vsub.f32 0.0, %v683
        %v716 = vmul.f32 %v684, 1.442695
        %v717 = vpow.pop %v716
        %v718 = vmul.f32 %v685, 1.442695
        %v719 = vpow.pop %v718
        %v720 = vmul.f32 %v686, 1.442695
        %v721 = vpow.pop %v720
        %v722 = vmul.f32 %v687, 1.442695
        %v723 = vpow.pop %v722
        %v724 = vmul.f32 %v688, 1.442695
        %v725 = vpow.pop %v724
        %v726 = vmul.f32 %v689, 1.442695
        %v727 = vpow.pop %v726
        %v728 = vmul.f32 %v690, 1.442695
        %v729 = vpow.pop %v728
        %v730 = vmul.f32 %v691, 1.442695
        %v731 = vpow.pop %v730
        %v732 = vmul.f32 %v692, 1.442695
        %v733 = vpow.pop %v732
        %v734 = vmul.f32 %v693, 1.442695
        %v735 = vpow.pop %v734
        %v736 = vmul.f32 %v694, 1.442695
        %v737 = vpow.pop %v736
        %v738 = vmul.f32 %v695, 1.442695
        %v739 = vpow.pop %v738
        %v740 = vmul.f32 %v696, 1.442695
        %v741 = vpow.pop %v740
        %v742 = vmul.f32 %v697, 1.442695
        %v743 = vpow.pop %v742
        %v744 = vmul.f32 %v698, 1.442695
        %v745 = vpow.pop %v744
        %v746 = vmul.f32 %v699, 1.442695
        %v747 = vpow.pop %v746
        %v748 = vmul.f32 %v700, 1.442695
        %v749 = vpow.pop %v748
        %v750 = vmul.f32 %v701, 1.442695
        %v751 = vpow.pop %v750
        %v752 = vmul.f32 %v702, 1.442695
        %v753 = vpow.pop %v752
        %v754 = vmul.f32 %v703, 1.442695
        %v755 = vpow.pop %v754
        %v756 = vmul.f32 %v704, 1.442695
        %v757 = vpow.pop %v756
        %v758 = vmul.f32 %v705, 1.442695
        %v759 = vpow.pop %v758
        %v760 = vmul.f32 %v706, 1.442695
        %v761 = vpow.pop %v760
        %v762 = vmul.f32 %v707, 1.442695
        %v763 = vpow.pop %v762
        %v764 = vmul.f32 %v708, 1.442695
        %v765 = vpow.pop %v764
        %v766 = vmul.f32 %v709, 1.442695
        %v767 = vpow.pop %v766
        %v768 = vmul.f32 %v710, 1.442695
        %v769 = vpow.pop %v768
        %v770 = vmul.f32 %v711, 1.442695
        %v771 = vpow.pop %v770
        %v772 = vmul.f32 %v712, 1.442695
        %v773 = vpow.pop %v772
        %v774 = vmul.f32 %v713, 1.442695
        %v775 = vpow.pop %v774
        %v776 = vmul.f32 %v714, 1.442695
        %v777 = vpow.pop %v776
        %v778 = vmul.f32 %v715, 1.442695
        %v779 = vpow.pop %v778
        %v780 = vadd.f32 %v717, 1.0
        %v781 = vlog2.pop %v780
        %v782 = vmul.f32 %v781, 0.6931472
        %v783 = vmul.f32 -0.5, %v717
        %v784 = vadd.f32 %v783, 1.0
        %v785 = vmul.f32 %v784, %v717
        %v786 = vand.u32 2147483647, %v717
        %vm787 = vcmp.lt.f32.partialorder %v786, 0.0004427343
        %v788 = vsel %vm787, %v785, %v782
        %v789 = vadd.f32 %v719, 1.0
        %v790 = vlog2.pop %v789
        %v791 = vmul.f32 %v790, 0.6931472
        %v792 = vmul.f32 -0.5, %v719
        %v793 = vadd.f32 %v792, 1.0
        %v794 = vmul.f32 %v793, %v719
        %v795 = vand.u32 2147483647, %v719
        %vm796 = vcmp.lt.f32.partialorder %v795, 0.0004427343
        %v797 = vsel %vm796, %v794, %v791
        %v798 = vadd.f32 %v721, 1.0
        %v799 = vlog2.pop %v798
        %v800 = vmul.f32 %v799, 0.6931472
        %v801 = vmul.f32 -0.5, %v721
        %v802 = vadd.f32 %v801, 1.0
        %v803 = vmul.f32 %v802, %v721
        %v804 = vand.u32 2147483647, %v721
        %vm805 = vcmp.lt.f32.partialorder %v804, 0.0004427343
        %v806 = vsel %vm805, %v803, %v800
        %v807 = vadd.f32 %v723, 1.0
        %v808 = vlog2.pop %v807
        %v809 = vmul.f32 %v808, 0.6931472
        %v810 = vmul.f32 -0.5, %v723
        %v811 = vadd.f32 %v810, 1.0
        %v812 = vmul.f32 %v811, %v723
        %v813 = vand.u32 2147483647, %v723
        %vm814 = vcmp.lt.f32.partialorder %v813, 0.0004427343
        %v815 = vsel %vm814, %v812, %v809
        %v816 = vadd.f32 %v725, 1.0
        %v817 = vlog2.pop %v816
        %v818 = vmul.f32 %v817, 0.6931472
        %v819 = vmul.f32 -0.5, %v725
        %v820 = vadd.f32 %v819, 1.0
        %v821 = vmul.f32 %v820, %v725
        %v822 = vand.u32 2147483647, %v725
        %vm823 = vcmp.lt.f32.partialorder %v822, 0.0004427343
        %v824 = vsel %vm823, %v821, %v818
        %v825 = vadd.f32 %v727, 1.0
        %v826 = vlog2.pop %v825
        %v827 = vmul.f32 %v826, 0.6931472
        %v828 = vmul.f32 -0.5, %v727
        %v829 = vadd.f32 %v828, 1.0
        %v830 = vmul.f32 %v829, %v727
        %v831 = vand.u32 2147483647, %v727
        %vm832 = vcmp.lt.f32.partialorder %v831, 0.0004427343
        %v833 = vsel %vm832, %v830, %v827
        %v834 = vadd.f32 %v729, 1.0
        %v835 = vlog2.pop %v834
        %v836 = vmul.f32 %v835, 0.6931472
        %v837 = vmul.f32 -0.5, %v729
        %v838 = vadd.f32 %v837, 1.0
        %v839 = vmul.f32 %v838, %v729
        %v840 = vand.u32 2147483647, %v729
        %vm841 = vcmp.lt.f32.partialorder %v840, 0.0004427343
        %v842 = vsel %vm841, %v839, %v836
        %v843 = vadd.f32 %v731, 1.0
        %v844 = vlog2.pop %v843
        %v845 = vmul.f32 %v844, 0.6931472
        %v846 = vmul.f32 -0.5, %v731
        %v847 = vadd.f32 %v846, 1.0
        %v848 = vmul.f32 %v847, %v731
        %v849 = vand.u32 2147483647, %v731
        %vm850 = vcmp.lt.f32.partialorder %v849, 0.0004427343
        %v851 = vsel %vm850, %v848, %v845
        %v852 = vadd.f32 %v733, 1.0
        %v853 = vlog2.pop %v852
        %v854 = vmul.f32 %v853, 0.6931472
        %v855 = vmul.f32 -0.5, %v733
        %v856 = vadd.f32 %v855, 1.0
        %v857 = vmul.f32 %v856, %v733
        %v858 = vand.u32 2147483647, %v733
        %vm859 = vcmp.lt.f32.partialorder %v858, 0.0004427343
        %v860 = vsel %vm859, %v857, %v854
        %v861 = vadd.f32 %v735, 1.0
        %v862 = vlog2.pop %v861
        %v863 = vmul.f32 %v862, 0.6931472
        %v864 = vmul.f32 -0.5, %v735
        %v865 = vadd.f32 %v864, 1.0
        %v866 = vmul.f32 %v865, %v735
        %v867 = vand.u32 2147483647, %v735
        %vm868 = vcmp.lt.f32.partialorder %v867, 0.0004427343
        %v869 = vsel %vm868, %v866, %v863
        %v870 = vadd.f32 %v737, 1.0
        %v871 = vlog2.pop %v870
        %v872 = vmul.f32 %v871, 0.6931472
        %v873 = vmul.f32 -0.5, %v737
        %v874 = vadd.f32 %v873, 1.0
        %v875 = vmul.f32 %v874, %v737
        %v876 = vand.u32 2147483647, %v737
        %vm877 = vcmp.lt.f32.partialorder %v876, 0.0004427343
        %v878 = vsel %vm877, %v875, %v872
        %v879 = vadd.f32 %v739, 1.0
        %v880 = vlog2.pop %v879
        %v881 = vmul.f32 %v880, 0.6931472
        %v882 = vmul.f32 -0.5, %v739
        %v883 = vadd.f32 %v882, 1.0
        %v884 = vmul.f32 %v883, %v739
        %v885 = vand.u32 2147483647, %v739
        %vm886 = vcmp.lt.f32.partialorder %v885, 0.0004427343
        %v887 = vsel %vm886, %v884, %v881
        %v888 = vadd.f32 %v741, 1.0
        %v889 = vlog2.pop %v888
        %v890 = vmul.f32 %v889, 0.6931472
        %v891 = vmul.f32 -0.5, %v741
        %v892 = vadd.f32 %v891, 1.0
        %v893 = vmul.f32 %v892, %v741
        %v894 = vand.u32 2147483647, %v741
        %vm895 = vcmp.lt.f32.partialorder %v894, 0.0004427343
        %v896 = vsel %vm895, %v893, %v890
        %v897 = vadd.f32 %v743, 1.0
        %v898 = vlog2.pop %v897
        %v899 = vmul.f32 %v898, 0.6931472
        %v900 = vmul.f32 -0.5, %v743
        %v901 = vadd.f32 %v900, 1.0
        %v902 = vmul.f32 %v901, %v743
        %v903 = vand.u32 2147483647, %v743
        %vm904 = vcmp.lt.f32.partialorder %v903, 0.0004427343
        %v905 = vsel %vm904, %v902, %v899
        %v906 = vadd.f32 %v745, 1.0
        %v907 = vlog2.pop %v906
        %v908 = vmul.f32 %v907, 0.6931472
        %v909 = vmul.f32 -0.5, %v745
        %v910 = vadd.f32 %v909, 1.0
        %v911 = vmul.f32 %v910, %v745
        %v912 = vand.u32 2147483647, %v745
        %vm913 = vcmp.lt.f32.partialorder %v912, 0.0004427343
        %v914 = vsel %vm913, %v911, %v908
        %v915 = vadd.f32 %v747, 1.0
        %v916 = vlog2.pop %v915
        %v917 = vmul.f32 %v916, 0.6931472
        %v918 = vmul.f32 -0.5, %v747
        %v919 = vadd.f32 %v918, 1.0
        %v920 = vmul.f32 %v919, %v747
        %v921 = vand.u32 2147483647, %v747
        %vm922 = vcmp.lt.f32.partialorder %v921, 0.0004427343
        %v923 = vsel %vm922, %v920, %v917
        %v924 = vadd.f32 %v749, 1.0
        %v925 = vlog2.pop %v924
        %v926 = vmul.f32 %v925, 0.6931472
        %v927 = vmul.f32 -0.5, %v749
        %v928 = vadd.f32 %v927, 1.0
        %v929 = vmul.f32 %v928, %v749
        %v930 = vand.u32 2147483647, %v749
        %vm931 = vcmp.lt.f32.partialorder %v930, 0.0004427343
        %v932 = vsel %vm931, %v929, %v926
        %v933 = vadd.f32 %v751, 1.0
        %v934 = vlog2.pop %v933
        %v935 = vmul.f32 %v934, 0.6931472
        %v936 = vmul.f32 -0.5, %v751
        %v937 = vadd.f32 %v936, 1.0
        %v938 = vmul.f32 %v937, %v751
        %v939 = vand.u32 2147483647, %v751
        %vm940 = vcmp.lt.f32.partialorder %v939, 0.0004427343
        %v941 = vsel %vm940, %v938, %v935
        %v942 = vadd.f32 %v753, 1.0
        %v943 = vlog2.pop %v942
        %v944 = vmul.f32 %v943, 0.6931472
        %v945 = vmul.f32 -0.5, %v753
        %v946 = vadd.f32 %v945, 1.0
        %v947 = vmul.f32 %v946, %v753
        %v948 = vand.u32 2147483647, %v753
        %vm949 = vcmp.lt.f32.partialorder %v948, 0.0004427343
        %v950 = vsel %vm949, %v947, %v944
        %v951 = vadd.f32 %v755, 1.0
        %v952 = vlog2.pop %v951
        %v953 = vmul.f32 %v952, 0.6931472
        %v954 = vmul.f32 -0.5, %v755
        %v955 = vadd.f32 %v954, 1.0
        %v956 = vmul.f32 %v955, %v755
        %v957 = vand.u32 2147483647, %v755
        %vm958 = vcmp.lt.f32.partialorder %v957, 0.0004427343
        %v959 = vsel %vm958, %v956, %v953
        %v960 = vadd.f32 %v757, 1.0
        %v961 = vlog2.pop %v960
        %v962 = vmul.f32 %v961, 0.6931472
        %v963 = vmul.f32 -0.5, %v757
        %v964 = vadd.f32 %v963, 1.0
        %v965 = vmul.f32 %v964, %v757
        %v966 = vand.u32 2147483647, %v757
        %vm967 = vcmp.lt.f32.partialorder %v966, 0.0004427343
        %v968 = vsel %vm967, %v965, %v962
        %v969 = vadd.f32 %v759, 1.0
        %v970 = vlog2.pop %v969
        %v971 = vmul.f32 %v970, 0.6931472
        %v972 = vmul.f32 -0.5, %v759
        %v973 = vadd.f32 %v972, 1.0
        %v974 = vmul.f32 %v973, %v759
        %v975 = vand.u32 2147483647, %v759
        %vm976 = vcmp.lt.f32.partialorder %v975, 0.0004427343
        %v977 = vsel %vm976, %v974, %v971
        %v978 = vadd.f32 %v761, 1.0
        %v979 = vlog2.pop %v978
        %v980 = vmul.f32 %v979, 0.6931472
        %v981 = vmul.f32 -0.5, %v761
        %v982 = vadd.f32 %v981, 1.0
        %v983 = vmul.f32 %v982, %v761
        %v984 = vand.u32 2147483647, %v761
        %vm985 = vcmp.lt.f32.partialorder %v984, 0.0004427343
        %v986 = vsel %vm985, %v983, %v980
        %v987 = vadd.f32 %v763, 1.0
        %v988 = vlog2.pop %v987
        %v989 = vmul.f32 %v988, 0.6931472
        %v990 = vmul.f32 -0.5, %v763
        %v991 = vadd.f32 %v990, 1.0
        %v992 = vmul.f32 %v991, %v763
        %v993 = vand.u32 2147483647, %v763
        %vm994 = vcmp.lt.f32.partialorder %v993, 0.0004427343
        %v995 = vsel %vm994, %v992, %v989
        %v996 = vadd.f32 %v765, 1.0
        %v997 = vlog2.pop %v996
        %v998 = vmul.f32 %v997, 0.6931472
        %v999 = vmul.f32 -0.5, %v765
        %v1000 = vadd.f32 %v999, 1.0
        %v1001 = vmul.f32 %v1000, %v765
        %v1002 = vand.u32 2147483647, %v765
        %vm1003 = vcmp.lt.f32.partialorder %v1002, 0.0004427343
        %v1004 = vsel %vm1003, %v1001, %v998
        %v1005 = vadd.f32 %v767, 1.0
        %v1006 = vlog2.pop %v1005
        %v1007 = vmul.f32 %v1006, 0.6931472
        %v1008 = vmul.f32 -0.5, %v767
        %v1009 = vadd.f32 %v1008, 1.0
        %v1010 = vmul.f32 %v1009, %v767
        %v1011 = vand.u32 2147483647, %v767
        %vm1012 = vcmp.lt.f32.partialorder %v1011, 0.0004427343
        %v1013 = vsel %vm1012, %v1010, %v1007
        %v1014 = vadd.f32 %v769, 1.0
        %v1015 = vlog2.pop %v1014
        %v1016 = vmul.f32 %v1015, 0.6931472
        %v1017 = vmul.f32 -0.5, %v769
        %v1018 = vadd.f32 %v1017, 1.0
        %v1019 = vmul.f32 %v1018, %v769
        %v1020 = vand.u32 2147483647, %v769
        %vm1021 = vcmp.lt.f32.partialorder %v1020, 0.0004427343
        %v1022 = vsel %vm1021, %v1019, %v1016
        %v1023 = vadd.f32 %v771, 1.0
        %v1024 = vlog2.pop %v1023
        %v1025 = vmul.f32 %v1024, 0.6931472
        %v1026 = vmul.f32 -0.5, %v771
        %v1027 = vadd.f32 %v1026, 1.0
        %v1028 = vmul.f32 %v1027, %v771
        %v1029 = vand.u32 2147483647, %v771
        %vm1030 = vcmp.lt.f32.partialorder %v1029, 0.0004427343
        %v1031 = vsel %vm1030, %v1028, %v1025
        %v1032 = vadd.f32 %v773, 1.0
        %v1033 = vlog2.pop %v1032
        %v1034 = vmul.f32 %v1033, 0.6931472
        %v1035 = vmul.f32 -0.5, %v773
        %v1036 = vadd.f32 %v1035, 1.0
        %v1037 = vmul.f32 %v1036, %v773
        %v1038 = vand.u32 2147483647, %v773
        %vm1039 = vcmp.lt.f32.partialorder %v1038, 0.0004427343
        %v1040 = vsel %vm1039, %v1037, %v1034
        %v1041 = vadd.f32 %v775, 1.0
        %v1042 = vlog2.pop %v1041
        %v1043 = vmul.f32 %v1042, 0.6931472
        %v1044 = vmul.f32 -0.5, %v775
        %v1045 = vadd.f32 %v1044, 1.0
        %v1046 = vmul.f32 %v1045, %v775
        %v1047 = vand.u32 2147483647, %v775
        %vm1048 = vcmp.lt.f32.partialorder %v1047, 0.0004427343
        %v1049 = vsel %vm1048, %v1046, %v1043
        %v1050 = vadd.f32 %v777, 1.0
        %v1051 = vlog2.pop %v1050
        %v1052 = vmul.f32 %v1051, 0.6931472
        %v1053 = vmul.f32 -0.5, %v777
        %v1054 = vadd.f32 %v1053, 1.0
        %v1055 = vmul.f32 %v1054, %v777
        %v1056 = vand.u32 2147483647, %v777
        %vm1057 = vcmp.lt.f32.partialorder %v1056, 0.0004427343
        %v1058 = vsel %vm1057, %v1055, %v1052
        %v1059 = vadd.f32 %v779, 1.0
        %v1060 = vlog2.pop %v1059
        %v1061 = vmul.f32 %v1060, 0.6931472
        %v1062 = vmul.f32 -0.5, %v779
        %v1063 = vadd.f32 %v1062, 1.0
        %v1064 = vmul.f32 %v1063, %v779
        %v1065 = vand.u32 2147483647, %v779
        %vm1066 = vcmp.lt.f32.partialorder %v1065, 0.0004427343
        %v1067 = vsel %vm1066, %v1064, %v1061
        %v1068 = vadd.f32 %v620, %v788
        %v1069 = vadd.f32 %v621, %v797
        %v1070 = vadd.f32 %v622, %v806
        %v1071 = vadd.f32 %v623, %v815
        %v1072 = vadd.f32 %v624, %v824
        %v1073 = vadd.f32 %v625, %v833
        %v1074 = vadd.f32 %v626, %v842
        %v1075 = vadd.f32 %v627, %v851
        %v1076 = vadd.f32 %v628, %v860
        %v1077 = vadd.f32 %v629, %v869
        %v1078 = vadd.f32 %v630, %v878
        %v1079 = vadd.f32 %v631, %v887
        %v1080 = vadd.f32 %v632, %v896
        %v1081 = vadd.f32 %v633, %v905
        %v1082 = vadd.f32 %v634, %v914
        %v1083 = vadd.f32 %v635, %v923
        %v1084 = vadd.f32 %v636, %v932
        %v1085 = vadd.f32 %v637, %v941
        %v1086 = vadd.f32 %v638, %v950
        %v1087 = vadd.f32 %v639, %v959
        %v1088 = vadd.f32 %v640, %v968
        %v1089 = vadd.f32 %v641, %v977
        %v1090 = vadd.f32 %v642, %v986
        %v1091 = vadd.f32 %v643, %v995
        %v1092 = vadd.f32 %v644, %v1004
        %v1093 = vadd.f32 %v645, %v1013
        %v1094 = vadd.f32 %v646, %v1022
        %v1095 = vadd.f32 %v647, %v1031
        %v1096 = vadd.f32 %v648, %v1040
        %v1097 = vadd.f32 %v649, %v1049
        %v1098 = vadd.f32 %v650, %v1058
        %v1099 = vadd.f32 %v651, %v1067
        %v1100 = vmul.f32 %v556, %v1068
        %v1101 = vmul.f32 %v557, %v1069
        %v1102 = vmul.f32 %v558, %v1070
        %v1103 = vmul.f32 %v559, %v1071
        %v1104 = vmul.f32 %v560, %v1072
        %v1105 = vmul.f32 %v561, %v1073
        %v1106 = vmul.f32 %v562, %v1074
        %v1107 = vmul.f32 %v563, %v1075
        %v1108 = vmul.f32 %v564, %v1076
        %v1109 = vmul.f32 %v565, %v1077
        %v1110 = vmul.f32 %v566, %v1078
        %v1111 = vmul.f32 %v567, %v1079
        %v1112 = vmul.f32 %v568, %v1080
        %v1113 = vmul.f32 %v569, %v1081
        %v1114 = vmul.f32 %v570, %v1082
        %v1115 = vmul.f32 %v571, %v1083
        %v1116 = vmul.f32 %v572, %v1084
        %v1117 = vmul.f32 %v573, %v1085
        %v1118 = vmul.f32 %v574, %v1086
        %v1119 = vmul.f32 %v575, %v1087
        %v1120 = vmul.f32 %v576, %v1088
        %v1121 = vmul.f32 %v577, %v1089
        %v1122 = vmul.f32 %v578, %v1090
        %v1123 = vmul.f32 %v579, %v1091
        %v1124 = vmul.f32 %v580, %v1092
        %v1125 = vmul.f32 %v581, %v1093
        %v1126 = vmul.f32 %v582, %v1094
        %v1127 = vmul.f32 %v583, %v1095
        %v1128 = vmul.f32 %v584, %v1096
        %v1129 = vmul.f32 %v585, %v1097
        %v1130 = vmul.f32 %v586, %v1098
        %v1131 = vmul.f32 %v587, %v1099
        %v1132 = vadd.f32 %v524, %v1100
        %v1133 = vadd.f32 %v525, %v1101
        %v1134 = vadd.f32 %v526, %v1102
        %v1135 = vadd.f32 %v527, %v1103
        %v1136 = vadd.f32 %v528, %v1104
        %v1137 = vadd.f32 %v529, %v1105
        %v1138 = vadd.f32 %v530, %v1106
        %v1139 = vadd.f32 %v531, %v1107
        %v1140 = vadd.f32 %v532, %v1108
        %v1141 = vadd.f32 %v533, %v1109
        %v1142 = vadd.f32 %v534, %v1110
        %v1143 = vadd.f32 %v535, %v1111
        %v1144 = vadd.f32 %v536, %v1112
        %v1145 = vadd.f32 %v537, %v1113
        %v1146 = vadd.f32 %v538, %v1114
        %v1147 = vadd.f32 %v539, %v1115
        %v1148 = vadd.f32 %v540, %v1116
        %v1149 = vadd.f32 %v541, %v1117
        %v1150 = vadd.f32 %v542, %v1118
        %v1151 = vadd.f32 %v543, %v1119
        %v1152 = vadd.f32 %v544, %v1120
        %v1153 = vadd.f32 %v545, %v1121
        %v1154 = vadd.f32 %v546, %v1122
        %v1155 = vadd.f32 %v547, %v1123
        %v1156 = vadd.f32 %v548, %v1124
        %v1157 = vadd.f32 %v549, %v1125
        %v1158 = vadd.f32 %v550, %v1126
        %v1159 = vadd.f32 %v551, %v1127
        %v1160 = vadd.f32 %v552, %v1128
        %v1161 = vadd.f32 %v553, %v1129
        %v1162 = vadd.f32 %v554, %v1130
        %v1163 = vadd.f32 %v555, %v1131
        %p1164 = scmp.eq.s32.totalorder %s40, 0
        // Predicated region
        $region65: #{tpu_custom_call.1} parent=47 // pred_check
          %p1165 = pneg %p1164
        $region66: #{tpu_custom_call.1} parent=47 // pred_check_branch
          %1167 = sbr.rel (%p1165) target = $region68
        $region67: #{tpu_custom_call.1} parent=47 // pred_region
          %v1168 = vld [vmem:[%s518] sm:$0x1]
          %v1169 = vmax.f32 %v1168, 0.0
          %v1170 = vand.u32 2147483647, %v1168
          %v1171 = vsub.f32 0.0, %v1170
          %v1172 = vmul.f32 %v1171, 1.442695
          %v1173 = vpow.pop %v1172
          %v1174 = vadd.f32 %v1173, 1.0
          %v1175 = vlog2.pop %v1174
          %v1176 = vmul.f32 %v1175, 0.6931472
          %v1177 = vmul.f32 -0.5, %v1173
          %v1178 = vadd.f32 %v1177, 1.0
          %v1179 = vmul.f32 %v1178, %v1173
          %v1180 = vand.u32 2147483647, %v1173
          %vm1181 = vcmp.lt.f32.partialorder %v1180, 0.0004427343
          %v1182 = vsel %vm1181, %v1179, %v1176
          %v1183 = vadd.f32 %v1169, %v1182
          %v1184 = vld [vmem:[%s521] sm:$0x1]
          %v1185 = vld [vmem:[%s515] sm:$0x1]
          %v1186 = vmul.f32 %v1184, %v1183
          %v1187 = vadd.f32 %v1185, %v1186
          %v1189 = vlaneseq
          %v1190 = vshrl.u32 %v1189, 7
          %v1191 = vsub.s32 0, %v1190
          %v1192 = vrot.slane %v1187, %v1191
          %1194 = vst [vmem:[#allocation2] sm:$0xff] %v1192
          %1195 = vst [vmem:[#allocation2 + $0x8] sm:$0xff] %v1192
          %v1196 = vmul.f32 %v1187, %v1187
          %v1197 = vmul.f32 %v1184, %v1184
          %v1198 = vsub.f32 %v1196, %v1197
          %v1199 = vmul.f32 %v1198, 0.5
          %v1200 = vlog2.pop %v1183
          %v1201 = vmul.f32 %v1200, 0.6931472
          %v1202 = vsub.f32 %v1199, %v1201
          %p1203 = scmp.eq.s32.totalorder %s38, 0
          %v1204 = vmul.f32 %v1202, 0.125
          %s1205 = scalar_select %p1203, 1, 0
          %v1206 = vstv %s1205
          %vm1207 = vcmp.eq.s32.totalorder %v1206, 1
          %v1208 = vsel %vm1207, %v1204, 0.0
          %v1210 = vlaneseq
          %v1211 = vshrl.u32 %v1210, 7
          %v1212 = vsub.s32 0, %v1211
          %v1213 = vrot.slane %v1208, %v1212
          %1215 = vst [vmem:[%s507] sm:$0xff] %v1213
        $region68: #{tpu_custom_call.1} parent=47 // pred_fallthru
          _
        %v1216 = vld [vmem:[#allocation2] sm:$0xff]
        %v1217 = vld [vmem:[#allocation2 + $0x8] sm:$0xff]
        %v1218 = vld [vmem:[#allocation3] sm:$0xff]
        %v1219 = vld [vmem:[#allocation3 + $0x8] sm:$0xff]
        %v1220 = vpack.c.bf16 %v1133, %v1132
        %v1221 = vpack.c.bf16 %v1135, %v1134
        %v1222 = vpack.c.bf16 %v1137, %v1136
        %v1223 = vpack.c.bf16 %v1139, %v1138
        %v1224 = vpack.c.bf16 %v1141, %v1140
        %v1225 = vpack.c.bf16 %v1143, %v1142
        %v1226 = vpack.c.bf16 %v1145, %v1144
        %v1227 = vpack.c.bf16 %v1147, %v1146
        %v1228 = vpack.c.bf16 %v1149, %v1148
        %v1229 = vpack.c.bf16 %v1151, %v1150
        %v1230 = vpack.c.bf16 %v1153, %v1152
        %v1231 = vpack.c.bf16 %v1155, %v1154
        %v1232 = vpack.c.bf16 %v1157, %v1156
        %v1233 = vpack.c.bf16 %v1159, %v1158
        %v1234 = vpack.c.bf16 %v1161, %v1160
        %v1235 = vpack.c.bf16 %v1163, %v1162
        %v1238 = vunpack.c.l.b16 %v1218
        %v1239 = vunpack.c.h.b16 %v1218
        %v1240 = vunpack.c.l.b16 %v1219
        %v1241 = vunpack.c.h.b16 %v1219
        %v1242 = vpack.c.b16 %v1240, %v1238
        %v1243 = vpack.c.b16 %v1241, %v1239
        %1246 = vmatprep.subr.bf16.mxu0 0
        %1247 = vmatpush1.bf16.msra.mxu0 %v1220
        %1248 = vmatprep.subr.bf16.mxu0 0
        %1249 = vmatpush1.bf16.msra.mxu0 %v1221
        %1250 = vmatprep.subr.bf16.mxu0 0
        %1251 = vmatpush1.bf16.msra.mxu0 %v1222
        %1252 = vmatprep.subr.bf16.mxu0 0
        %1253 = vmatpush1.bf16.msra.mxu0 %v1223
        %1254 = vmatprep.subr.bf16.mxu0 0
        %1255 = vmatpush1.bf16.msra.mxu0 %v1224
        %1256 = vmatprep.subr.bf16.mxu0 0
        %1257 = vmatpush1.bf16.msra.mxu0 %v1225
        %1258 = vmatprep.subr.bf16.mxu0 0
        %1259 = vmatpush1.bf16.msra.mxu0 %v1226
        %1260 = vmatprep.subr.bf16.mxu0 0
        %1261 = vmatpush1.bf16.msra.mxu0 %v1227
        %1262 = vmatprep.subr.bf16.mxu0 0
        %1263 = vmatpush1.bf16.msra.mxu0 %v1228
        %1264 = vmatprep.subr.bf16.mxu0 0
        %1265 = vmatpush1.bf16.msra.mxu0 %v1229
        %1266 = vmatprep.subr.bf16.mxu0 0
        %1267 = vmatpush1.bf16.msra.mxu0 %v1230
        %1268 = vmatprep.subr.bf16.mxu0 0
        %1269 = vmatpush1.bf16.msra.mxu0 %v1231
        %1270 = vmatprep.subr.bf16.mxu0 0
        %1271 = vmatpush1.bf16.msra.mxu0 %v1232
        %1272 = vmatprep.subr.bf16.mxu0 0
        %1273 = vmatpush1.bf16.msra.mxu0 %v1233
        %1274 = vmatprep.subr.bf16.mxu0 0
        %1275 = vmatpush1.bf16.msra.mxu0 %v1234
        %1276 = vmatprep.subr.bf16.mxu0 0
        %1277 = vmatpush1.bf16.msra.mxu0 %v1235
        %1278 = vmatprep.mubr.bf16.mxu0 %v1243
        %1279 = vmatmul.mubr.bf16.gmra.mrb[0].mxu0 %v1242
        %v1280 = vpop.f32.mrb[0].mxu0
        %v1281 = vadd.f32 0.0, %v1280
        %v1282 = vpop.f32.mrb[0].mxu0
        %v1283 = vpop.f32.mrb[0].mxu0
        %v1284 = vadd.f32 0.0, %v1283
        %v1285 = vpop.f32.mrb[0].mxu0
        %1286 = vdwg.mxu0
        %v1287 = vadd.f32 %v1216, %v1281
        %v1288 = vadd.f32 %v1217, %v1284
        %1289 = vst [vmem:[#allocation2] sm:$0xff] %v1287
        %1290 = vst [vmem:[#allocation2 + $0x8] sm:$0xff] %v1288
        // Predicated region
        $region69: #{tpu_custom_call.1} parent=47 // pred_check
          %p1291 = pneg %p1164
        $region70: #{tpu_custom_call.1} parent=47 // pred_check_branch
          %1293 = sbr.rel (%p1291) target = $region72
        $region71: #{tpu_custom_call.1} parent=47 // pred_region
          %v1294 = vld [vmem:[#allocation2] sm:$0xff]
          %v1295 = vld [vmem:[#allocation2 + $0x8] sm:$0xff]
          %1296 = vst [vmem:[%s500] sm:$0xff] %v1294
          %1297 = vst [vmem:[%s500 + $0x8] sm:$0xff] %v1295
        $region72: #{tpu_custom_call.1} parent=47 // pred_fallthru
          _
        %p1298 = scmp.eq.s32.totalorder %s38, 0
        // Predicated region
        $region73: #{tpu_custom_call.1} parent=47 // pred_check
          %p1299 = pneg %p1298
        $region74: #{tpu_custom_call.1} parent=47 // pred_check_branch
          %1301 = sbr.rel (%p1299) target = $region76
        $region75: #{tpu_custom_call.1} parent=47 // pred_region
          %v1302 = vmul.f32 %v1132, %v1132
          %v1303 = vmul.f32 %v1133, %v1133
          %v1304 = vmul.f32 %v1134, %v1134
          %v1305 = vmul.f32 %v1135, %v1135
          %v1306 = vmul.f32 %v1136, %v1136
          %v1307 = vmul.f32 %v1137, %v1137
          %v1308 = vmul.f32 %v1138, %v1138
          %v1309 = vmul.f32 %v1139, %v1139
          %v1310 = vmul.f32 %v1140, %v1140
          %v1311 = vmul.f32 %v1141, %v1141
          %v1312 = vmul.f32 %v1142, %v1142
          %v1313 = vmul.f32 %v1143, %v1143
          %v1314 = vmul.f32 %v1144, %v1144
          %v1315 = vmul.f32 %v1145, %v1145
          %v1316 = vmul.f32 %v1146, %v1146
          %v1317 = vmul.f32 %v1147, %v1147
          %v1318 = vmul.f32 %v1148, %v1148
          %v1319 = vmul.f32 %v1149, %v1149
          %v1320 = vmul.f32 %v1150, %v1150
          %v1321 = vmul.f32 %v1151, %v1151
          %v1322 = vmul.f32 %v1152, %v1152
          %v1323 = vmul.f32 %v1153, %v1153
          %v1324 = vmul.f32 %v1154, %v1154
          %v1325 = vmul.f32 %v1155, %v1155
          %v1326 = vmul.f32 %v1156, %v1156
          %v1327 = vmul.f32 %v1157, %v1157
          %v1328 = vmul.f32 %v1158, %v1158
          %v1329 = vmul.f32 %v1159, %v1159
          %v1330 = vmul.f32 %v1160, %v1160
          %v1331 = vmul.f32 %v1161, %v1161
          %v1332 = vmul.f32 %v1162, %v1162
          %v1333 = vmul.f32 %v1163, %v1163
          %v1334 = vmul.f32 %v556, %v556
          %v1335 = vmul.f32 %v557, %v557
          %v1336 = vmul.f32 %v558, %v558
          %v1337 = vmul.f32 %v559, %v559
          %v1338 = vmul.f32 %v560, %v560
          %v1339 = vmul.f32 %v561, %v561
          %v1340 = vmul.f32 %v562, %v562
          %v1341 = vmul.f32 %v563, %v563
          %v1342 = vmul.f32 %v564, %v564
          %v1343 = vmul.f32 %v565, %v565
          %v1344 = vmul.f32 %v566, %v566
          %v1345 = vmul.f32 %v567, %v567
          %v1346 = vmul.f32 %v568, %v568
          %v1347 = vmul.f32 %v569, %v569
          %v1348 = vmul.f32 %v570, %v570
          %v1349 = vmul.f32 %v571, %v571
          %v1350 = vmul.f32 %v572, %v572
          %v1351 = vmul.f32 %v573, %v573
          %v1352 = vmul.f32 %v574, %v574
          %v1353 = vmul.f32 %v575, %v575
          %v1354 = vmul.f32 %v576, %v576
          %v1355 = vmul.f32 %v577, %v577
          %v1356 = vmul.f32 %v578, %v578
          %v1357 = vmul.f32 %v579, %v579
          %v1358 = vmul.f32 %v580, %v580
          %v1359 = vmul.f32 %v581, %v581
          %v1360 = vmul.f32 %v582, %v582
          %v1361 = vmul.f32 %v583, %v583
          %v1362 = vmul.f32 %v584, %v584
          %v1363 = vmul.f32 %v585, %v585
          %v1364 = vmul.f32 %v586, %v586
          %v1365 = vmul.f32 %v587, %v587
          %v1366 = vsub.f32 %v1302, %v1334
          %v1367 = vsub.f32 %v1303, %v1335
          %v1368 = vsub.f32 %v1304, %v1336
          %v1369 = vsub.f32 %v1305, %v1337
          %v1370 = vsub.f32 %v1306, %v1338
          %v1371 = vsub.f32 %v1307, %v1339
          %v1372 = vsub.f32 %v1308, %v1340
          %v1373 = vsub.f32 %v1309, %v1341
          %v1374 = vsub.f32 %v1310, %v1342
          %v1375 = vsub.f32 %v1311, %v1343
          %v1376 = vsub.f32 %v1312, %v1344
          %v1377 = vsub.f32 %v1313, %v1345
          %v1378 = vsub.f32 %v1314, %v1346
          %v1379 = vsub.f32 %v1315, %v1347
          %v1380 = vsub.f32 %v1316, %v1348
          %v1381 = vsub.f32 %v1317, %v1349
          %v1382 = vsub.f32 %v1318, %v1350
          %v1383 = vsub.f32 %v1319, %v1351
          %v1384 = vsub.f32 %v1320, %v1352
          %v1385 = vsub.f32 %v1321, %v1353
          %v1386 = vsub.f32 %v1322, %v1354
          %v1387 = vsub.f32 %v1323, %v1355
          %v1388 = vsub.f32 %v1324, %v1356
          %v1389 = vsub.f32 %v1325, %v1357
          %v1390 = vsub.f32 %v1326, %v1358
          %v1391 = vsub.f32 %v1327, %v1359
          %v1392 = vsub.f32 %v1328, %v1360
          %v1393 = vsub.f32 %v1329, %v1361
          %v1394 = vsub.f32 %v1330, %v1362
          %v1395 = vsub.f32 %v1331, %v1363
          %v1396 = vsub.f32 %v1332, %v1364
          %v1397 = vsub.f32 %v1333, %v1365
          %v1398 = vmul.f32 %v1366, 0.5
          %v1399 = vmul.f32 %v1367, 0.5
          %v1400 = vmul.f32 %v1368, 0.5
          %v1401 = vmul.f32 %v1369, 0.5
          %v1402 = vmul.f32 %v1370, 0.5
          %v1403 = vmul.f32 %v1371, 0.5
          %v1404 = vmul.f32 %v1372, 0.5
          %v1405 = vmul.f32 %v1373, 0.5
          %v1406 = vmul.f32 %v1374, 0.5
          %v1407 = vmul.f32 %v1375, 0.5
          %v1408 = vmul.f32 %v1376, 0.5
          %v1409 = vmul.f32 %v1377, 0.5
          %v1410 = vmul.f32 %v1378, 0.5
          %v1411 = vmul.f32 %v1379, 0.5
          %v1412 = vmul.f32 %v1380, 0.5
          %v1413 = vmul.f32 %v1381, 0.5
          %v1414 = vmul.f32 %v1382, 0.5
          %v1415 = vmul.f32 %v1383, 0.5
          %v1416 = vmul.f32 %v1384, 0.5
          %v1417 = vmul.f32 %v1385, 0.5
          %v1418 = vmul.f32 %v1386, 0.5
          %v1419 = vmul.f32 %v1387, 0.5
          %v1420 = vmul.f32 %v1388, 0.5
          %v1421 = vmul.f32 %v1389, 0.5
          %v1422 = vmul.f32 %v1390, 0.5
          %v1423 = vmul.f32 %v1391, 0.5
          %v1424 = vmul.f32 %v1392, 0.5
          %v1425 = vmul.f32 %v1393, 0.5
          %v1426 = vmul.f32 %v1394, 0.5
          %v1427 = vmul.f32 %v1395, 0.5
          %v1428 = vmul.f32 %v1396, 0.5
          %v1429 = vmul.f32 %v1397, 0.5
          %v1430 = vlog2.pop %v1068
          %v1431 = vmul.f32 %v1430, 0.6931472
          %v1432 = vlog2.pop %v1069
          %v1433 = vmul.f32 %v1432, 0.6931472
          %v1434 = vlog2.pop %v1070
          %v1435 = vmul.f32 %v1434, 0.6931472
          %v1436 = vlog2.pop %v1071
          %v1437 = vmul.f32 %v1436, 0.6931472
          %v1438 = vlog2.pop %v1072
          %v1439 = vmul.f32 %v1438, 0.6931472
          %v1440 = vlog2.pop %v1073
          %v1441 = vmul.f32 %v1440, 0.6931472
          %v1442 = vlog2.pop %v1074
          %v1443 = vmul.f32 %v1442, 0.6931472
          %v1444 = vlog2.pop %v1075
          %v1445 = vmul.f32 %v1444, 0.6931472
          %v1446 = vlog2.pop %v1076
          %v1447 = vmul.f32 %v1446, 0.6931472
          %v1448 = vlog2.pop %v1077
          %v1449 = vmul.f32 %v1448, 0.6931472
          %v1450 = vlog2.pop %v1078
          %v1451 = vmul.f32 %v1450, 0.6931472
          %v1452 = vlog2.pop %v1079
          %v1453 = vmul.f32 %v1452, 0.6931472
          %v1454 = vlog2.pop %v1080
          %v1455 = vmul.f32 %v1454, 0.6931472
          %v1456 = vlog2.pop %v1081
          %v1457 = vmul.f32 %v1456, 0.6931472
          %v1458 = vlog2.pop %v1082
          %v1459 = vmul.f32 %v1458, 0.6931472
          %v1460 = vlog2.pop %v1083
          %v1461 = vmul.f32 %v1460, 0.6931472
          %v1462 = vlog2.pop %v1084
          %v1463 = vmul.f32 %v1462, 0.6931472
          %v1464 = vlog2.pop %v1085
          %v1465 = vmul.f32 %v1464, 0.6931472
          %v1466 = vlog2.pop %v1086
          %v1467 = vmul.f32 %v1466, 0.6931472
          %v1468 = vlog2.pop %v1087
          %v1469 = vmul.f32 %v1468, 0.6931472
          %v1470 = vlog2.pop %v1088
          %v1471 = vmul.f32 %v1470, 0.6931472
          %v1472 = vlog2.pop %v1089
          %v1473 = vmul.f32 %v1472, 0.6931472
          %v1474 = vlog2.pop %v1090
          %v1475 = vmul.f32 %v1474, 0.6931472
          %v1476 = vlog2.pop %v1091
          %v1477 = vmul.f32 %v1476, 0.6931472
          %v1478 = vlog2.pop %v1092
          %v1479 = vmul.f32 %v1478, 0.6931472
          %v1480 = vlog2.pop %v1093
          %v1481 = vmul.f32 %v1480, 0.6931472
          %v1482 = vlog2.pop %v1094
          %v1483 = vmul.f32 %v1482, 0.6931472
          %v1484 = vlog2.pop %v1095
          %v1485 = vmul.f32 %v1484, 0.6931472
          %v1486 = vlog2.pop %v1096
          %v1487 = vmul.f32 %v1486, 0.6931472
          %v1488 = vlog2.pop %v1097
          %v1489 = vmul.f32 %v1488, 0.6931472
          %v1490 = vlog2.pop %v1098
          %v1491 = vmul.f32 %v1490, 0.6931472
          %v1492 = vlog2.pop %v1099
          %v1493 = vmul.f32 %v1492, 0.6931472
          %v1494 = vsub.f32 %v1398, %v1431
          %v1495 = vsub.f32 %v1399, %v1433
          %v1496 = vsub.f32 %v1400, %v1435
          %v1497 = vsub.f32 %v1401, %v1437
          %v1498 = vsub.f32 %v1402, %v1439
          %v1499 = vsub.f32 %v1403, %v1441
          %v1500 = vsub.f32 %v1404, %v1443
          %v1501 = vsub.f32 %v1405, %v1445
          %v1502 = vsub.f32 %v1406, %v1447
          %v1503 = vsub.f32 %v1407, %v1449
          %v1504 = vsub.f32 %v1408, %v1451
          %v1505 = vsub.f32 %v1409, %v1453
          %v1506 = vsub.f32 %v1410, %v1455
          %v1507 = vsub.f32 %v1411, %v1457
          %v1508 = vsub.f32 %v1412, %v1459
          %v1509 = vsub.f32 %v1413, %v1461
          %v1510 = vsub.f32 %v1414, %v1463
          %v1511 = vsub.f32 %v1415, %v1465
          %v1512 = vsub.f32 %v1416, %v1467
          %v1513 = vsub.f32 %v1417, %v1469
          %v1514 = vsub.f32 %v1418, %v1471
          %v1515 = vsub.f32 %v1419, %v1473
          %v1516 = vsub.f32 %v1420, %v1475
          %v1517 = vsub.f32 %v1421, %v1477
          %v1518 = vsub.f32 %v1422, %v1479
          %v1519 = vsub.f32 %v1423, %v1481
          %v1520 = vsub.f32 %v1424, %v1483
          %v1521 = vsub.f32 %v1425, %v1485
          %v1522 = vsub.f32 %v1426, %v1487
          %v1523 = vsub.f32 %v1427, %v1489
          %v1524 = vsub.f32 %v1428, %v1491
          %v1525 = vsub.f32 %v1429, %v1493
          %v1526 = vadd.f32 %v1494, %v1495
          %v1527 = vadd.f32 %v1526, %v1496
          %v1528 = vadd.f32 %v1527, %v1497
          %v1529 = vadd.f32 %v1528, %v1498
          %v1530 = vadd.f32 %v1529, %v1499
          %v1531 = vadd.f32 %v1530, %v1500
          %v1532 = vadd.f32 %v1531, %v1501
          %v1533 = vadd.f32 %v1532, %v1502
          %v1534 = vadd.f32 %v1533, %v1503
          %v1535 = vadd.f32 %v1534, %v1504
          %v1536 = vadd.f32 %v1535, %v1505
          %v1537 = vadd.f32 %v1536, %v1506
          %v1538 = vadd.f32 %v1537, %v1507
          %v1539 = vadd.f32 %v1538, %v1508
          %v1540 = vadd.f32 %v1539, %v1509
          %v1541 = vadd.f32 %v1540, %v1510
          %v1542 = vadd.f32 %v1541, %v1511
          %v1543 = vadd.f32 %v1542, %v1512
          %v1544 = vadd.f32 %v1543, %v1513
          %v1545 = vadd.f32 %v1544, %v1514
          %v1546 = vadd.f32 %v1545, %v1515
          %v1547 = vadd.f32 %v1546, %v1516
          %v1548 = vadd.f32 %v1547, %v1517
          %v1549 = vadd.f32 %v1548, %v1518
          %v1550 = vadd.f32 %v1549, %v1519
          %v1551 = vadd.f32 %v1550, %v1520
          %v1552 = vadd.f32 %v1551, %v1521
          %v1553 = vadd.f32 %v1552, %v1522
          %v1554 = vadd.f32 %v1553, %v1523
          %v1555 = vadd.f32 %v1554, %v1524
          %v1556 = vadd.f32 %v1555, %v1525
          %v1557 = vld [vmem:[%s507] sm:$0xff]
          %v1558 = vadd.f32 %v1557, %v1556
          %1559 = vst [vmem:[%s507] sm:$0xff] %v1558
        $region76: #{tpu_custom_call.1} parent=47 // pred_fallthru
          _
        %s1560 = sand.u32 %s252, 1
        %s1561 = scalar_lea.sflag [#allocation5], %s1560
        %s1562 = sand.u32 %s252, 1
        %s1563 = smul.addr %s1562, 16
        %s1564 = scalar_lea.vmem [#allocation11], %s1563
        %s1565 = sand.u32 %s280, 1
        %s1566 = scalar_lea.sflag [#allocation13], %s1565
        %s1567 = sand.u32 %s280, 1
        %s1568 = smul.addr %s1567, 8
        %s1569 = scalar_lea.vmem [#allocation12], %s1568
        // Predicated region
        $region77: #{tpu_custom_call.1} parent=47 // pred_check
          %p1570 = pneg %p262
        $region78: #{tpu_custom_call.1} parent=47 // pred_check_branch
          %1572 = sbr.rel (%p1570) target = $region80
        $region79: #{tpu_custom_call.1} parent=47 // pred_region
          %s1573 = smul.u32 2, %s38
          %s1575 = ssub.s32 256, 256
          %1576 = vsyncadd %s1561, %s1575
          %s1577 = smul.addr %s1573, 2
          %s1578 = sadd.s32 %s39, %s1577
          %s1579 = smul.addr %s1578, 128
          %s1580 = scalar_lea.hbm %s7, %s1579
          %s1581 = sshll.u32 %s1564, 4
          %s1582 = int_to_ptr.vmem [resolvable:$true] %s1581
          %1587 = dma.vmem_to_hbm [thread:$0]  %s1582, 256, %s1580, %s1561, 128, 256, 8
        $region80: #{tpu_custom_call.1} parent=47 // pred_fallthru
          _
        // Predicated region
        $region81: #{tpu_custom_call.1} parent=47 // pred_check
          %p1588 = pneg %p290
        $region82: #{tpu_custom_call.1} parent=47 // pred_check_branch
          %1590 = sbr.rel (%p1588) target = $region84
        $region83: #{tpu_custom_call.1} parent=47 // pred_region
          %s1592 = ssub.s32 128, 128
          %1593 = vsyncadd %s1566, %s1592
          %s1594 = smul.addr %s38, 2
          %s1595 = sadd.s32 %s39, %s1594
          %s1596 = smul.addr %s1595, 128
          %s1597 = scalar_lea.hbm %s8, %s1596
          %s1599 = sshll.u32 %s1569, 4
          %s1600 = int_to_ptr.vmem [resolvable:$true] %s1599
          %1602 = dma.vmem_to_hbm [thread:$0]  %s1600, 128, %s1597, %s1566
        $region84: #{tpu_custom_call.1} parent=47 // pred_fallthru
          _
      $region48: #{tpu_custom_call.1} parent=5 // pred_fallthru
        _
      %p1603 = scmp.le.s32.totalorder 2, %s28
      // Predicated region
      $region85: #{tpu_custom_call.1} parent=5 // pred_check
        %p1604 = pneg %p1603
      $region86: #{tpu_custom_call.1} parent=5 // pred_check_branch
        %1606 = sbr.rel (%p1604) target = $region88
      $region87: #{tpu_custom_call.1} parent=5 // pred_region
        %s1607 = ssub.s32 %s28, 2
        // Predicated region
        $region89: #{tpu_custom_call.1} parent=87 // pred_check
          %p1608 = pneg %p268
        $region90: #{tpu_custom_call.1} parent=87 // pred_check_branch
          %1610 = sbr.rel (%p1608) target = $region92
        $region91: #{tpu_custom_call.1} parent=87 // pred_region
          %s1611 = sand.u32 %s253, 1
          %s1612 = scalar_lea.sflag [#allocation5], %s1611
          %s1613 = sand.u32 %s253, 1
          %s1614 = smul.addr %s1613, 16
          %s1615 = scalar_lea.vmem [#allocation11], %s1614
          %1616 = dma.done %s1612, 256
        $region92: #{tpu_custom_call.1} parent=87 // pred_fallthru
          _
        // Predicated region
        $region93: #{tpu_custom_call.1} parent=87 // pred_check
          %p1617 = pneg %p296
        $region94: #{tpu_custom_call.1} parent=87 // pred_check_branch
          %1619 = sbr.rel (%p1617) target = $region96
        $region95: #{tpu_custom_call.1} parent=87 // pred_region
          %s1620 = sand.u32 %s281, 1
          %s1621 = scalar_lea.sflag [#allocation13], %s1620
          %s1622 = sand.u32 %s281, 1
          %s1623 = smul.addr %s1622, 8
          %s1624 = scalar_lea.vmem [#allocation12], %s1623
          %1625 = dma.done %s1621, 128
        $region96: #{tpu_custom_call.1} parent=87 // pred_fallthru
          _
      $region88: #{tpu_custom_call.1} parent=5 // pred_fallthru
        _
    $region6: #{tpu_custom_call.1} parent=1 // loop_footer
      %s32 = sadd.s32 1, %s28
    $region7: #{tpu_custom_call.1} parent=1 // loop_footer_branch
      %27 = sbr.rel target = $region3
    $region8: #{tpu_custom_call.1} parent=1 // loop_exit
      _
    %1626 = vsyncpa [#allocation4], 1
    %s1627 = scalar_lea.sflag [#allocation4], 1
    %1628 = vsyncpa %s1627, 1
    %1629 = vsyncpa [#allocation7], 1
    %s1630 = scalar_lea.sflag [#allocation7], 1
    %1631 = vsyncpa %s1630, 1
    %1632 = vsyncpa [#allocation10], 1
    %s1633 = scalar_lea.sflag [#allocation10], 1
    %1634 = vsyncpa %s1633, 1
    %1635 = vsyncpa [#allocation5], 1
    %s1636 = scalar_lea.sflag [#allocation5], 1
    %1637 = vsyncpa %s1636, 1
    %1638 = vsyncpa [#allocation13], 1
    %s1639 = scalar_lea.sflag [#allocation13], 1
    %1640 = vsyncpa %s1639, 1

</llo_original>
